<compile_context>
chip_gen: v7x
topology: tpu7x:2x2x1
jax: 0.10.0
libtpu: 0.0.40
codegen_flags: <defaults>
</compile_context>

<pallas_src>
import functools

import jax
import jax.numpy as jnp
from jax.experimental import pallas as pl
from jax.experimental.pallas import tpu as pltpu


LANE = 128  # pad tiny output widths up to one lane-width for dense stores


def _round_up(x, m):
    return ((x + m - 1) // m) * m


# ----------------------------------------------------------------------------
# In-kernel im2col: write 9 shifted windows of the padded image into a VMEM
# scratch (H*W, 9*C) so the conv becomes a single bf16 MXU matmul.
# ----------------------------------------------------------------------------
def _im2col_into(patch_ref, x_full, H, W, C):
    for dy in range(3):
        for dx in range(3):
            k = dy * 3 + dx
            win = x_full[dy:dy + H, dx:dx + W, :]                # (H, W, C) bf16
            patch_ref[:, k * C:(k + 1) * C] = win.reshape(H * W, C)


# ----------------------------------------------------------------------------
# Kernel A: fused 3x3 conv (stride 1, pad 1) + bias + ReLU, one image per step.
# ----------------------------------------------------------------------------
def _conv3x3_kernel(x_ref, w_ref, b_ref, o_ref, patch_ref, *, H, W, C, relu):
    x_full = x_ref[0]                                            # (H+2, W+2, C) bf16
    _im2col_into(patch_ref, x_full, H, W, C)
    acc = jnp.dot(patch_ref[...], w_ref[...],
                  preferred_element_type=jnp.float32)            # (H*W, F) f32
    acc = acc + b_ref[...]
    if relu:
        acc = jnp.maximum(acc, 0.0)
    o_ref[...] = acc.reshape(1, H * W, -1).astype(o_ref.dtype)


def conv3x3(x_nhwc, w_mat, b_row, *, relu=True, out_dtype=jnp.bfloat16):
    """3x3 same conv: x (N,H,W,C) -> (N,H,W,F) in one fused pallas_call."""
    N, H, W, C = x_nhwc.shape
    F = w_mat.shape[1]
    xp = jnp.pad(x_nhwc.astype(jnp.bfloat16), ((0, 0), (1, 1), (1, 1), (0, 0)))
    out = pl.pallas_call(
        functools.partial(_conv3x3_kernel, H=H, W=W, C=C, relu=relu),
        out_shape=jax.ShapeDtypeStruct((N, H * W, F), out_dtype),
        grid_spec=pltpu.PrefetchScalarGridSpec(
            num_scalar_prefetch=0,
            grid=(N,),
            in_specs=[
                pl.BlockSpec((1, H + 2, W + 2, C), lambda n: (n, 0, 0, 0)),
                pl.BlockSpec((9 * C, F), lambda n: (0, 0)),
                pl.BlockSpec((1, F), lambda n: (0, 0)),
            ],
            out_specs=pl.BlockSpec((1, H * W, F), lambda n: (n, 0, 0)),
            scratch_shapes=[pltpu.VMEM((H * W, 9 * C), jnp.bfloat16)],
        ),
        compiler_params=pltpu.CompilerParams(
            dimension_semantics=("parallel",)),
    )(xp, w_mat, b_row)
    return out.reshape(N, H, W, F)


# ----------------------------------------------------------------------------
# Kernel B: RPN fused — 3x3 conv + ReLU, then the concatenated loc/score
# 1x1 heads, all in one call; the mid feature map never leaves VMEM.
# ----------------------------------------------------------------------------
def _rpn_fused_kernel(x_ref, wc_ref, bc_ref, wh_ref, bh_ref, o_ref, patch_ref,
                      *, H, W, C):
    x_full = x_ref[0]                                            # (H+2, W+2, C) bf16
    _im2col_into(patch_ref, x_full, H, W, C)
    mid = jnp.dot(patch_ref[...], wc_ref[...],
                  preferred_element_type=jnp.float32)            # (H*W, mid) f32
    mid = jnp.maximum(mid + bc_ref[...], 0.0).astype(jnp.bfloat16)
    y = jnp.dot(mid, wh_ref[...],
                preferred_element_type=jnp.float32) + bh_ref[...]  # (H*W, 128) f32
    o_ref[...] = y.reshape(1, H * W, -1)


# ----------------------------------------------------------------------------
# Kernel C: head fused — fc1(relu) -> fc2(relu) -> {cls_loc | score} in one
# call; (R, hidden) intermediates stay in VMEM, lane-dense (R, 128) output.
# ----------------------------------------------------------------------------
def _head_fused_kernel(x_ref, w1_ref, b1_ref, w2_ref, b2_ref, w3_ref, b3_ref,
                       o_ref):
    t = jnp.dot(x_ref[...], w1_ref[...], preferred_element_type=jnp.float32)
    t = jnp.maximum(t + b1_ref[...], 0.0).astype(jnp.bfloat16)
    t = jnp.dot(t, w2_ref[...], preferred_element_type=jnp.float32)
    t = jnp.maximum(t + b2_ref[...], 0.0).astype(jnp.bfloat16)
    y = jnp.dot(t, w3_ref[...], preferred_element_type=jnp.float32) + b3_ref[...]
    o_ref[...] = y


# ----------------------------------------------------------------------------
# RPN helpers (plain-JAX glue)
# ----------------------------------------------------------------------------
def generate_anchor_base(base_size=4.0, ratios=(0.5, 1.0, 2.0), scales=(1.0,)):
    py = px = base_size / 2.0
    anchors = []
    for r in ratios:
        for s in scales:
            h = base_size * s * jnp.sqrt(r)
            w = base_size * s * jnp.sqrt(1.0 / r)
            anchors.append(jnp.stack([py - h / 2, px - w / 2, py + h / 2, px + w / 2]))
    return jnp.stack(anchors).astype(jnp.float32)                # (A,4)


def enumerate_shifted_anchors(anchor_base, feat_stride, H, W):
    sy = jnp.arange(H, dtype=jnp.float32) * feat_stride
    sx = jnp.arange(W, dtype=jnp.float32) * feat_stride
    yy, xx = jnp.meshgrid(sy, sx, indexing="ij")
    shifts = jnp.stack([yy, xx, yy, xx], axis=-1).reshape(-1, 1, 4)  # (H*W,1,4)
    anchors = shifts + anchor_base[None, :, :]                       # (H*W,A,4)
    return anchors.reshape(-1, 4)                                    # (h,w,a) order


def loc2bbox(src_bbox, loc):
    h = src_bbox[:, 2] - src_bbox[:, 0]
    w = src_bbox[:, 3] - src_bbox[:, 1]
    cy = src_bbox[:, 0] + 0.5 * h
    cx = src_bbox[:, 1] + 0.5 * w
    dy, dx, dh, dw = loc[:, 0], loc[:, 1], loc[:, 2], loc[:, 3]
    ctr_y = dy * h + cy
    ctr_x = dx * w + cx
    nh = jnp.exp(dh) * h
    nw = jnp.exp(dw) * w
    return jnp.stack([ctr_y - 0.5 * nh, ctr_x - 0.5 * nw,
                      ctr_y + 0.5 * nh, ctr_x + 0.5 * nw], axis=1)


# ----------------------------------------------------------------------------
# Model stages
# ----------------------------------------------------------------------------
def extractor_forward(x_nhwc, p):
    return conv3x3(x_nhwc, p["ext_w_mat"], p["ext_b"], relu=True)    # (N,H,W,F) bf16


def rpn_forward(h, img_size, scale, p):
    N, H, W, F = h.shape
    A = p["n_anchor"]
    mid_dim = p["rpn_conv_w_mat"].shape[1]
    hp = jnp.pad(h, ((0, 0), (1, 1), (1, 1), (0, 0)))

    out = pl.pallas_call(
        functools.partial(_rpn_fused_kernel, H=H, W=W, C=F),
        out_shape=jax.ShapeDtypeStruct((N, H * W, LANE), jnp.float32),
        grid_spec=pltpu.PrefetchScalarGridSpec(
            num_scalar_prefetch=0,
            grid=(N,),
            in_specs=[
                pl.BlockSpec((1, H + 2, W + 2, F), lambda n: (n, 0, 0, 0)),
                pl.BlockSpec((9 * F, mid_dim), lambda n: (0, 0)),
                pl.BlockSpec((1, mid_dim), lambda n: (0, 0)),
                pl.BlockSpec((mid_dim, LANE), lambda n: (0, 0)),
                pl.BlockSpec((1, LANE), lambda n: (0, 0)),
            ],
            out_specs=pl.BlockSpec((1, H * W, LANE), lambda n: (n, 0, 0)),
            scratch_shapes=[pltpu.VMEM((H * W, 9 * F), jnp.bfloat16)],
        ),
        compiler_params=pltpu.CompilerParams(
            dimension_semantics=("parallel",)),
    )(hp, p["rpn_conv_w_mat"], p["rpn_conv_b"], p["rpn_head_w"], p["rpn_head_b"])

    rpn_locs = out[:, :, :A * 4].reshape(N, H * W * A, 4)
    rpn_scores = out[:, :, A * 4:A * 6].reshape(N, H * W * A, 2)

    anchor = enumerate_shifted_anchors(p["anchor_base"], p["feat_stride"], H, W)
    n_rois = p["n_rois_per_image"]
    min_size = 1.0 * scale

    def per_image(locs_i, scores_i):
        bbox = loc2bbox(anchor, locs_i)
        bbox = jnp.stack([
            jnp.clip(bbox[:, 0], 0.0, img_size[0]),
            jnp.clip(bbox[:, 1], 0.0, img_size[1]),
            jnp.clip(bbox[:, 2], 0.0, img_size[0]),
            jnp.clip(bbox[:, 3], 0.0, img_size[1]),
        ], axis=1)
        fg = jax.nn.softmax(scores_i, axis=1)[:, 1]
        hs = bbox[:, 2] - bbox[:, 0]
        ws = bbox[:, 3] - bbox[:, 1]
        keep = (hs >= min_size) & (ws >= min_size)
        fg = jnp.where(keep, fg, -jnp.inf)
        # TODO(synk): proposal NMS has no clean Pallas equivalent; plain top-k selection.
        _, top = jax.lax.top_k(fg, n_rois)
        return bbox[top]

    rois = jax.vmap(per_image)(rpn_locs, rpn_scores)                 # (N, n_rois, 4)
    rois = rois.reshape(N * n_rois, 4)
    roi_indices = jnp.repeat(jnp.arange(N, dtype=jnp.int32), n_rois)
    return rpn_locs, rpn_scores, rois, roi_indices, anchor


def head_forward(h, rois, roi_indices, p):
    N, H, W, F = h.shape
    P = p["pool_size"]
    R = rois.shape[0]
    # TODO(synk): true RoIPool (max over variable-size bins) is dynamic-shaped; one
    # nearest sample per bin, gathered in XLA (could become a scalar-prefetch DMA gather).
    bin_c = (jnp.arange(P, dtype=jnp.float32) + 0.5) / P
    ys = rois[:, 0:1] + bin_c[None, :] * (rois[:, 2] - rois[:, 0])[:, None]   # (R,P)
    xs = rois[:, 1:2] + bin_c[None, :] * (rois[:, 3] - rois[:, 1])[:, None]
    yi = jnp.clip(jnp.round(ys / p["feat_stride"]).astype(jnp.int32), 0, H - 1)
    xi = jnp.clip(jnp.round(xs / p["feat_stride"]).astype(jnp.int32), 0, W - 1)
    pooled = h[roi_indices[:, None, None], yi[:, :, None], xi[:, None, :], :]  # (R,P,P,F)
    flat = pooled.reshape(R, P * P * F).astype(jnp.bfloat16)

    Rp = _round_up(R, 8)
    if Rp != R:
        flat = jnp.pad(flat, ((0, Rp - R), (0, 0)))

    K = flat.shape[1]
    Hd = p["fc1_w"].shape[1]
    out = pl.pallas_call(
        _head_fused_kernel,
        out_shape=jax.ShapeDtypeStruct((Rp, LANE), jnp.float32),
        grid_spec=pltpu.PrefetchScalarGridSpec(
            num_scalar_prefetch=0,
            grid=(1,),
            in_specs=[
                pl.BlockSpec((Rp, K), lambda i: (0, 0)),
                pl.BlockSpec((K, Hd), lambda i: (0, 0)),
                pl.BlockSpec((1, Hd), lambda i: (0, 0)),
                pl.BlockSpec((Hd, Hd), lambda i: (0, 0)),
                pl.BlockSpec((1, Hd), lambda i: (0, 0)),
                pl.BlockSpec((Hd, LANE), lambda i: (0, 0)),
                pl.BlockSpec((1, LANE), lambda i: (0, 0)),
            ],
            out_specs=pl.BlockSpec((Rp, LANE), lambda i: (0, 0)),
        ),
        compiler_params=pltpu.CompilerParams(
            dimension_semantics=("arbitrary",)),
    )(flat, p["fc1_w"], p["fc1_b"], p["fc2_w"], p["fc2_b"],
      p["head_out_w"], p["head_out_b"])

    n_class = p["n_class"]
    roi_cls_locs = out[:R, :n_class * 4]
    roi_scores = out[:R, n_class * 4:n_class * 4 + n_class]
    return roi_cls_locs, roi_scores


def faster_rcnn_forward(x_nchw, params, scale=1.0):
    """Matches FasterRCNN.forward: returns (roi_cls_locs, roi_scores, rois, roi_indices)."""
    img_size = (float(x_nchw.shape[2]), float(x_nchw.shape[3]))
    x = jnp.transpose(x_nchw, (0, 2, 3, 1)).astype(jnp.bfloat16)     # NCHW -> NHWC bf16
    h = extractor_forward(x, params)
    rpn_locs, rpn_scores, rois, roi_indices, anchor = rpn_forward(h, img_size, scale, params)
    roi_cls_locs, roi_scores = head_forward(h, rois, roi_indices, params)
    return roi_cls_locs, roi_scores, rois, roi_indices


# ----------------------------------------------------------------------------
# Deterministic synthetic parameters (pre-packed for the fused kernels)
# ----------------------------------------------------------------------------
def make_params(key, c_in=4, feat=32, mid=32, n_anchor=3, n_class=5,
                pool_size=2, hidden=32, n_rois_per_image=8):
    ks = jax.random.split(key, 12)
    nrm = lambda k, shp, s=0.05: (s * jax.random.normal(k, shp)).astype(jnp.float32)

    ext_w = nrm(ks[0], (3, 3, c_in, feat))
    rpn_conv_w = nrm(ks[1], (3, 3, feat, mid))
    rpn_loc_w = nrm(ks[2], (mid, n_anchor * 4), 0.01)
    rpn_score_w = nrm(ks[3], (mid, n_anchor * 2), 0.01)
    fc1_w = nrm(ks[4], (pool_size * pool_size * feat, hidden))
    fc2_w = nrm(ks[5], (hidden, hidden))
    cls_loc_w = nrm(ks[6], (hidden, n_class * 4), 0.001)
    score_w = nrm(ks[7], (hidden, n_class), 0.01)

    # Fuse the RPN loc/score heads and lane-pad to 128 output columns.
    rpn_head_w = jnp.concatenate([rpn_loc_w, rpn_score_w], axis=1)   # (mid, A*6)
    rpn_head_w = jnp.pad(rpn_head_w, ((0, 0), (0, LANE - rpn_head_w.shape[1])))
    # Fuse the head cls_loc/score outputs and lane-pad to 128 output columns.
    head_out_w = jnp.concatenate([cls_loc_w, score_w], axis=1)       # (hidden, 5*n_class)
    head_out_w = jnp.pad(head_out_w, ((0, 0), (0, LANE - head_out_w.shape[1])))

    params = {
        # conv weights packed HWIO -> (9*Cin, Cout), bf16 for the MXU
        "ext_w_mat": ext_w.reshape(9 * c_in, feat).astype(jnp.bfloat16),
        "ext_b": jnp.zeros((1, feat), jnp.float32),
        "rpn_conv_w_mat": rpn_conv_w.reshape(9 * feat, mid).astype(jnp.bfloat16),
        "rpn_conv_b": jnp.zeros((1, mid), jnp.float32),
        "rpn_head_w": rpn_head_w.astype(jnp.bfloat16),
        "rpn_head_b": jnp.zeros((1, LANE), jnp.float32),
        "fc1_w": fc1_w.astype(jnp.bfloat16),
        "fc1_b": jnp.zeros((1, hidden), jnp.float32),
        "fc2_w": fc2_w.astype(jnp.bfloat16),
        "fc2_b": jnp.zeros((1, hidden), jnp.float32),
        "head_out_w": head_out_w.astype(jnp.bfloat16),
        "head_out_b": jnp.zeros((1, LANE), jnp.float32),
        "anchor_base": generate_anchor_base(base_size=4.0),
        "n_anchor": n_anchor,
        "n_class": n_class,
        "feat_stride": 1.0,
        "pool_size": pool_size,
        "n_rois_per_image": n_rois_per_image,
    }
    return params


if __name__ == "__main__":
    key = jax.random.PRNGKey(0)
    kx, kp = jax.random.split(key)
    x = jax.random.normal(kx, (2, 4, 16, 16), dtype=jnp.float32)     # NCHW like PyTorch
    params = make_params(kp)

    roi_cls_locs, roi_scores, rois, roi_indices = faster_rcnn_forward(x, params, scale=1.0)
    jax.block_until_ready((roi_cls_locs, roi_scores, rois, roi_indices))

    assert roi_cls_locs.shape == (16, 20)       # (R', (L+1)*4)
    assert roi_scores.shape == (16, 5)          # (R', L+1)
    assert rois.shape == (16, 4)
    assert roi_indices.shape == (16,)
    print("KERNEL_OK")
</pallas_src>

<mosaic_0001>
module attributes {stable_mosaic.version = 11 : i64} {
  func.func @_conv3x3_kernel(%arg0: i32, %arg1: memref<1x18x18x4xbf16, #tpu.memory_space<vmem>>, %arg2: memref<36x32xbf16, #tpu.memory_space<vmem>>, %arg3: memref<1x32xf32, #tpu.memory_space<vmem>>, %arg4: memref<1x256x32xbf16, #tpu.memory_space<vmem>>, %arg5: memref<256x36xbf16, #tpu.memory_space<vmem>>) attributes {dimension_semantics = [#tpu.dimension_semantics<parallel>], iteration_bounds = array<i64: 2>, scalar_prefetch = 0 : i64, scratch_operands = 1 : i64, tpu.core_type = #tpu.core_type<tc>, window_params = [{transform_indices = @transform_0, window_bounds = array<i64: 1, 18, 18, 4>}, {pipeline_mode = #tpu.pipeline_mode<synchronous>, transform_indices = @transform_1, window_bounds = array<i64: 36, 32>}, {pipeline_mode = #tpu.pipeline_mode<synchronous>, transform_indices = @transform_2, window_bounds = array<i64: 1, 32>}, {transform_indices = @transform_3, window_bounds = array<i64: 1, 256, 32>}]} {
    %c0 = arith.constant 0 : index
    %c0_0 = arith.constant 0 : index
    %c0_1 = arith.constant 0 : index
    %c0_2 = arith.constant 0 : index
    %0 = vector.load %arg1[%c0, %c0_0, %c0_1, %c0_2] : memref<1x18x18x4xbf16, #tpu.memory_space<vmem>>, vector<1x18x18x4xbf16>
    %1 = vector.shape_cast %0 : vector<1x18x18x4xbf16> to vector<18x18x4xbf16>
    %2 = vector.extract_strided_slice %1 {offsets = [0, 0, 0], sizes = [16, 16, 4], strides = [1, 1, 1]} : vector<18x18x4xbf16> to vector<16x16x4xbf16>
    %3 = vector.shape_cast %2 : vector<16x16x4xbf16> to vector<256x4xbf16>
    %c0_3 = arith.constant 0 : index
    %c0_4 = arith.constant 0 : index
    %4 = vector.load %arg5[%c0_3, %c0_4] : memref<256x36xbf16, #tpu.memory_space<vmem>>, vector<256x4xbf16>
    tpu.vector_store %arg5[%c0_3, %c0_4], %3 {strides = array<i32>} : memref<256x36xbf16, #tpu.memory_space<vmem>>, vector<256x4xbf16>,
    %5 = vector.extract_strided_slice %1 {offsets = [0, 1, 0], sizes = [16, 16, 4], strides = [1, 1, 1]} : vector<18x18x4xbf16> to vector<16x16x4xbf16>
    %6 = vector.shape_cast %5 : vector<16x16x4xbf16> to vector<256x4xbf16>
    %c0_5 = arith.constant 0 : index
    %c4 = arith.constant 4 : index
    %7 = vector.load %arg5[%c0_5, %c4] : memref<256x36xbf16, #tpu.memory_space<vmem>>, vector<256x4xbf16>
    tpu.vector_store %arg5[%c0_5, %c4], %6 {strides = array<i32>} : memref<256x36xbf16, #tpu.memory_space<vmem>>, vector<256x4xbf16>,
    %8 = vector.extract_strided_slice %1 {offsets = [0, 2, 0], sizes = [16, 16, 4], strides = [1, 1, 1]} : vector<18x18x4xbf16> to vector<16x16x4xbf16>
    %9 = vector.shape_cast %8 : vector<16x16x4xbf16> to vector<256x4xbf16>
    %c0_6 = arith.constant 0 : index
    %c8 = arith.constant 8 : index
    %10 = vector.load %arg5[%c0_6, %c8] : memref<256x36xbf16, #tpu.memory_space<vmem>>, vector<256x4xbf16>
    tpu.vector_store %arg5[%c0_6, %c8], %9 {strides = array<i32>} : memref<256x36xbf16, #tpu.memory_space<vmem>>, vector<256x4xbf16>,
    %11 = vector.extract_strided_slice %1 {offsets = [1, 0, 0], sizes = [16, 16, 4], strides = [1, 1, 1]} : vector<18x18x4xbf16> to vector<16x16x4xbf16>
    %12 = vector.shape_cast %11 : vector<16x16x4xbf16> to vector<256x4xbf16>
    %c0_7 = arith.constant 0 : index
    %c12 = arith.constant 12 : index
    %13 = vector.load %arg5[%c0_7, %c12] : memref<256x36xbf16, #tpu.memory_space<vmem>>, vector<256x4xbf16>
    tpu.vector_store %arg5[%c0_7, %c12], %12 {strides = array<i32>} : memref<256x36xbf16, #tpu.memory_space<vmem>>, vector<256x4xbf16>,
    %14 = vector.extract_strided_slice %1 {offsets = [1, 1, 0], sizes = [16, 16, 4], strides = [1, 1, 1]} : vector<18x18x4xbf16> to vector<16x16x4xbf16>
    %15 = vector.shape_cast %14 : vector<16x16x4xbf16> to vector<256x4xbf16>
    %c0_8 = arith.constant 0 : index
    %c16 = arith.constant 16 : index
    %16 = vector.load %arg5[%c0_8, %c16] : memref<256x36xbf16, #tpu.memory_space<vmem>>, vector<256x4xbf16>
    tpu.vector_store %arg5[%c0_8, %c16], %15 {strides = array<i32>} : memref<256x36xbf16, #tpu.memory_space<vmem>>, vector<256x4xbf16>,
    %17 = vector.extract_strided_slice %1 {offsets = [1, 2, 0], sizes = [16, 16, 4], strides = [1, 1, 1]} : vector<18x18x4xbf16> to vector<16x16x4xbf16>
    %18 = vector.shape_cast %17 : vector<16x16x4xbf16> to vector<256x4xbf16>
    %c0_9 = arith.constant 0 : index
    %c20 = arith.constant 20 : index
    %19 = vector.load %arg5[%c0_9, %c20] : memref<256x36xbf16, #tpu.memory_space<vmem>>, vector<256x4xbf16>
    tpu.vector_store %arg5[%c0_9, %c20], %18 {strides = array<i32>} : memref<256x36xbf16, #tpu.memory_space<vmem>>, vector<256x4xbf16>,
    %20 = vector.extract_strided_slice %1 {offsets = [2, 0, 0], sizes = [16, 16, 4], strides = [1, 1, 1]} : vector<18x18x4xbf16> to vector<16x16x4xbf16>
    %21 = vector.shape_cast %20 : vector<16x16x4xbf16> to vector<256x4xbf16>
    %c0_10 = arith.constant 0 : index
    %c24 = arith.constant 24 : index
    %22 = vector.load %arg5[%c0_10, %c24] : memref<256x36xbf16, #tpu.memory_space<vmem>>, vector<256x4xbf16>
    tpu.vector_store %arg5[%c0_10, %c24], %21 {strides = array<i32>} : memref<256x36xbf16, #tpu.memory_space<vmem>>, vector<256x4xbf16>,
    %23 = vector.extract_strided_slice %1 {offsets = [2, 1, 0], sizes = [16, 16, 4], strides = [1, 1, 1]} : vector<18x18x4xbf16> to vector<16x16x4xbf16>
    %24 = vector.shape_cast %23 : vector<16x16x4xbf16> to vector<256x4xbf16>
    %c0_11 = arith.constant 0 : index
    %c28 = arith.constant 28 : index
    %25 = vector.load %arg5[%c0_11, %c28] : memref<256x36xbf16, #tpu.memory_space<vmem>>, vector<256x4xbf16>
    tpu.vector_store %arg5[%c0_11, %c28], %24 {strides = array<i32>} : memref<256x36xbf16, #tpu.memory_space<vmem>>, vector<256x4xbf16>,
    %26 = vector.extract_strided_slice %1 {offsets = [2, 2, 0], sizes = [16, 16, 4], strides = [1, 1, 1]} : vector<18x18x4xbf16> to vector<16x16x4xbf16>
    %27 = vector.shape_cast %26 : vector<16x16x4xbf16> to vector<256x4xbf16>
    %c0_12 = arith.constant 0 : index
    %c32 = arith.constant 32 : index
    %28 = vector.load %arg5[%c0_12, %c32] : memref<256x36xbf16, #tpu.memory_space<vmem>>, vector<256x4xbf16>
    tpu.vector_store %arg5[%c0_12, %c32], %27 {strides = array<i32>} : memref<256x36xbf16, #tpu.memory_space<vmem>>, vector<256x4xbf16>,
    %c0_13 = arith.constant 0 : index
    %c0_14 = arith.constant 0 : index
    %29 = vector.load %arg5[%c0_13, %c0_14] : memref<256x36xbf16, #tpu.memory_space<vmem>>, vector<256x36xbf16>
    %c0_15 = arith.constant 0 : index
    %c0_16 = arith.constant 0 : index
    %30 = vector.load %arg2[%c0_15, %c0_16] : memref<36x32xbf16, #tpu.memory_space<vmem>>, vector<36x32xbf16>
    %cst = arith.constant dense<0.000000e+00> : vector<256x32xf32>
    %31 = tpu.matmul %29, %30, %cst {dimension_numbers = #tpu.dot_dimension_numbers<[1], [0], [0], [1], [0, 0, 1, 1], [], []>} : vector<256x36xbf16>, vector<36x32xbf16>, vector<256x32xf32> -> vector<256x32xf32>
    %c0_17 = arith.constant 0 : index
    %c0_18 = arith.constant 0 : index
    %32 = vector.load %arg3[%c0_17, %c0_18] : memref<1x32xf32, #tpu.memory_space<vmem>>, vector<1x32xf32>
    %33 = vector.broadcast %32 : vector<1x32xf32> to vector<256x32xf32>
    %34 = arith.addf %31, %33 : vector<256x32xf32>
    %cst_19 = arith.constant 0.000000e+00 : f32
    %35 = vector.broadcast %cst_19 : f32 to vector<256x32xf32>
    %36 = arith.maximumf %34, %35 : vector<256x32xf32>
    %37 = vector.shape_cast %36 : vector<256x32xf32> to vector<1x256x32xf32>
    %38 = arith.truncf %37 : vector<1x256x32xf32> to vector<1x256x32xbf16>
    %c0_20 = arith.constant 0 : index
    %c0_21 = arith.constant 0 : index
    %c0_22 = arith.constant 0 : index
    %39 = vector.load %arg4[%c0_20, %c0_21, %c0_22] : memref<1x256x32xbf16, #tpu.memory_space<vmem>>, vector<1x256x32xbf16>
    tpu.vector_store %arg4[%c0_20, %c0_21, %c0_22], %38 {strides = array<i32>} : memref<1x256x32xbf16, #tpu.memory_space<vmem>>, vector<1x256x32xbf16>,
    return
  }
  func.func @transform_0(%arg0: i32) -> (i32, i32, i32, i32) {
    %c0_i32 = arith.constant 0 : i32
    %c0_i32_0 = arith.constant 0 : i32
    %c0_i32_1 = arith.constant 0 : i32
    %c0_i32_2 = arith.constant 0 : i32
    return %arg0, %c0_i32, %c0_i32_0, %c0_i32_1 : i32, i32, i32, i32
  }
  func.func @transform_1(%arg0: i32) -> (i32, i32) {
    %c0_i32 = arith.constant 0 : i32
    %c0_i32_0 = arith.constant 0 : i32
    %c0_i32_1 = arith.constant 0 : i32
    return %c0_i32, %c0_i32_0 : i32, i32
  }
  func.func @transform_2(%arg0: i32) -> (i32, i32) {
    %c0_i32 = arith.constant 0 : i32
    %c0_i32_0 = arith.constant 0 : i32
    %c0_i32_1 = arith.constant 0 : i32
    return %c0_i32, %c0_i32_0 : i32, i32
  }
  func.func @transform_3(%arg0: i32) -> (i32, i32, i32) {
    %c0_i32 = arith.constant 0 : i32
    %c0_i32_0 = arith.constant 0 : i32
    %c0_i32_1 = arith.constant 0 : i32
    return %arg0, %c0_i32, %c0_i32_0 : i32, i32, i32
  }
}

</mosaic_0001>

<llo_original>
// kernel: tpu_custom_call.1
$region0: #{tpu_custom_call.1}
  #allocation0 [shape = 'u32[]', space=smem, size = 0x4, offset = 0x4, fixed_abs, tag = 'smem constant byte address 0x4 - core index']
  #allocation1 [shape = 'u32[144,128]{1,0:T(1,128)}', space=vmem, size = 0x12000, scoped, tag = 'internal scratch']
  #allocation2 [shape = 'bf16[256,36]{1,0:T(16,128)(2,1)}', space=vmem, size = 0x10000, scoped, tag = 'scratch operand']
  %s0 = inlined_call_operand.vmem [shape: bf16[2,18,18,4], index: 0, kind: input, shape index: {}]
  %s1 = inlined_call_operand.vmem [shape: bf16[36,32], index: 1, kind: input, shape index: {}]
  %s2 = inlined_call_operand.vmem [shape: f32[1,32], index: 2, kind: input, shape index: {}]
  %s3 = inlined_call_operand.vmem [shape: bf16[2,256,32], index: 3, kind: output, shape index: {}]
  %s4 = sld [smem:[#allocation0]]
  $region45: #{tpu_custom_call.1} parent=0
    _
  %s6 = ssub.s32 1, %s4
  %s7 = scalar_select 0, %s6, %s4
  loop: start=0, step=1, limit=4
  $region2: #{tpu_custom_call.1} parent=0 // loop_pre_header
    _
  $region3: #{tpu_custom_call.1} parent=0 // loop_header
    %s9 = sphi 0, %s13
    %p10 = scmp.ge.s32.totalorder %s9, 4
    %s19 = sphi 0, %s21
    %s22 = sphi 0, %s19
    %s23 = sphi 0, %s22
    %s39 = sphi 0, %s23
    %s43 = sphi 0, %s43
    %s45 = sphi 0, %s43
    %s46 = sphi 0, %s45
    %s60 = sphi 0, %s46
    %s64 = sphi 0, %s64
    %s66 = sphi 0, %s64
    %s67 = sphi 0, %s66
    %s81 = sphi 0, %s67
    %s87 = sphi 0, %s89
    %s90 = sphi 0, %s87
    %s91 = sphi 0, %s90
    %s107 = sphi 0, %s91
  $region4: #{tpu_custom_call.1} parent=0 // loop_header_branch
    %12 = sbr.rel (%p10) target = $region8
  $region5: #{tpu_custom_call.1} parent=0 // loop_body
    %s14 = ssub.s32 %s9, 1
    %s15 = ssub.s32 %s9, 2
    %s16 = sadd.s32 %s9, 1
    %s17 = ssub.s32 %s9, %s16
    %p18 = scmp.eq.s32.totalorder %s17, 0
    %s20 = sadd.s32 %s19, 1
    %s21 = scalar_select %p18, %s19, %s20
    %p24 = pneg %p18
    %p25 = scmp.eq.s32.totalorder %s9, 1
    %p26 = por %p24, %p25
    %p27 = scmp.ne.s32.totalorder %s19, %s22
    %p28 = scmp.eq.s32.totalorder %s9, 0
    %p29 = por %p27, %p28
    %p30 = scmp.ne.s32.totalorder %s19, %s22
    %p31 = scmp.eq.s32.totalorder %s14, 1
    %p32 = por %p30, %p31
    %p33 = scmp.ne.s32.totalorder %s22, %s23
    %p34 = scmp.eq.s32.totalorder %s14, 0
    %p35 = por %p33, %p34
    %p36 = scmp.ne.s32.totalorder %s22, %s23
    %p37 = scmp.eq.s32.totalorder %s15, 1
    %p38 = por %p36, %p37
    %p40 = scmp.ne.s32.totalorder %s23, %s39
    %p41 = scmp.eq.s32.totalorder %s15, 0
    %p42 = por %p40, %p41
    %s44 = sadd.s32 %s43, 1
    %p47 = scmp.eq.s32.totalorder %s9, 1
    %p48 = scmp.ne.s32.totalorder %s43, %s45
    %p49 = scmp.eq.s32.totalorder %s9, 0
    %p50 = por %p48, %p49
    %p51 = scmp.ne.s32.totalorder %s43, %s45
    %p52 = scmp.eq.s32.totalorder %s14, 1
    %p53 = por %p51, %p52
    %p54 = scmp.ne.s32.totalorder %s45, %s46
    %p55 = scmp.eq.s32.totalorder %s14, 0
    %p56 = por %p54, %p55
    %p57 = scmp.ne.s32.totalorder %s45, %s46
    %p58 = scmp.eq.s32.totalorder %s15, 1
    %p59 = por %p57, %p58
    %p61 = scmp.ne.s32.totalorder %s46, %s60
    %p62 = scmp.eq.s32.totalorder %s15, 0
    %p63 = por %p61, %p62
    %s65 = sadd.s32 %s64, 1
    %p68 = scmp.eq.s32.totalorder %s9, 1
    %p69 = scmp.ne.s32.totalorder %s64, %s66
    %p70 = scmp.eq.s32.totalorder %s9, 0
    %p71 = por %p69, %p70
    %p72 = scmp.ne.s32.totalorder %s64, %s66
    %p73 = scmp.eq.s32.totalorder %s14, 1
    %p74 = por %p72, %p73
    %p75 = scmp.ne.s32.totalorder %s66, %s67
    %p76 = scmp.eq.s32.totalorder %s14, 0
    %p77 = por %p75, %p76
    %p78 = scmp.ne.s32.totalorder %s66, %s67
    %p79 = scmp.eq.s32.totalorder %s15, 1
    %p80 = por %p78, %p79
    %p82 = scmp.ne.s32.totalorder %s67, %s81
    %p83 = scmp.eq.s32.totalorder %s15, 0
    %p84 = por %p82, %p83
    %s85 = ssub.s32 %s9, %s16
    %p86 = scmp.eq.s32.totalorder %s85, 0
    %s88 = sadd.s32 %s87, 1
    %s89 = scalar_select %p86, %s87, %s88
    %p92 = pneg %p86
    %p93 = scmp.eq.s32.totalorder %s9, 1
    %p94 = por %p92, %p93
    %p95 = scmp.ne.s32.totalorder %s87, %s90
    %p96 = scmp.eq.s32.totalorder %s9, 0
    %p97 = por %p95, %p96
    %p98 = scmp.ne.s32.totalorder %s87, %s90
    %p99 = scmp.eq.s32.totalorder %s14, 1
    %p100 = por %p98, %p99
    %p101 = scmp.ne.s32.totalorder %s90, %s91
    %p102 = scmp.eq.s32.totalorder %s14, 0
    %p103 = por %p101, %p102
    %p104 = scmp.ne.s32.totalorder %s90, %s91
    %p105 = scmp.eq.s32.totalorder %s15, 1
    %p106 = por %p104, %p105
    %p108 = scmp.ne.s32.totalorder %s91, %s107
    %p109 = scmp.eq.s32.totalorder %s15, 0
    %p110 = por %p108, %p109
    %p111 = scmp.le.s32.totalorder 1, %s9
    %p112 = scmp.lt.s32.totalorder %s9, 3
    %p113 = pnand %p111, %p112
    %p114 = pneg %p113
    // Predicated region
    $region9: #{tpu_custom_call.1} parent=5 // pred_check
      _
    $region10: #{tpu_custom_call.1} parent=5 // pred_check_branch
      %116 = sbr.rel (%p113) target = $region12
    $region11: #{tpu_custom_call.1} parent=5 // pred_region
      %s117 = ssub.s32 %s9, 1
      // Predicated region
      $region13: #{tpu_custom_call.1} parent=11 // pred_check
        %p118 = pneg %p56
      $region14: #{tpu_custom_call.1} parent=11 // pred_check_branch
        %120 = sbr.rel (%p118) target = $region16
      $region15: #{tpu_custom_call.1} parent=11 // pred_region
        _
      $region16: #{tpu_custom_call.1} parent=11 // pred_fallthru
        _
      // Predicated region
      $region17: #{tpu_custom_call.1} parent=11 // pred_check
        %p121 = pneg %p77
      $region18: #{tpu_custom_call.1} parent=11 // pred_check_branch
        %123 = sbr.rel (%p121) target = $region20
      $region19: #{tpu_custom_call.1} parent=11 // pred_region
        _
      $region20: #{tpu_custom_call.1} parent=11 // pred_fallthru
        _
    $region12: #{tpu_custom_call.1} parent=5 // pred_fallthru
      _
    %p124 = scmp.lt.s32.totalorder %s9, 2
    // Predicated region
    $region21: #{tpu_custom_call.1} parent=5 // pred_check
      %p125 = pneg %p124
    $region22: #{tpu_custom_call.1} parent=5 // pred_check_branch
      %127 = sbr.rel (%p125) target = $region24
    $region23: #{tpu_custom_call.1} parent=5 // pred_region
      // Predicated region
      $region25: #{tpu_custom_call.1} parent=23 // pred_check
        %p128 = pneg %p29
      $region26: #{tpu_custom_call.1} parent=23 // pred_check_branch
        %130 = sbr.rel (%p128) target = $region28
      $region27: #{tpu_custom_call.1} parent=23 // pred_region
        %p131 = scmp.lt.s32.totalorder %s9, 1
        %s132 = scalar_select %p131, %s9, 1
        %s133 = smul.addr %s132, 54
        %s134 = smul.addr %s133, 4
        %s135 = scalar_lea.vmem %s0, %s134
      $region28: #{tpu_custom_call.1} parent=23 // pred_fallthru
        _
    $region24: #{tpu_custom_call.1} parent=5 // pred_fallthru
      _
    %p136 = scmp.le.s32.totalorder 1, %s9
    %p137 = scmp.lt.s32.totalorder %s9, 3
    %p138 = pnand %p136, %p137
    %p139 = pneg %p138
    // Predicated region
    $region29: #{tpu_custom_call.1} parent=5 // pred_check
      _
    $region30: #{tpu_custom_call.1} parent=5 // pred_check_branch
      %141 = sbr.rel (%p138) target = $region32
    $region31: #{tpu_custom_call.1} parent=5 // pred_region
      %s142 = ssub.s32 %s9, 1
      %p143 = scmp.lt.s32.totalorder %s14, 1
      %s144 = scalar_select %p143, %s14, 1
      %s145 = smul.addr %s144, 54
      %s146 = smul.addr %s145, 4
      %s147 = scalar_lea.vmem %s0, %s146
      %p148 = pneg %p35
      %p149 = pneg %p32
      %p150 = pneg %p56
      %p151 = pneg %p53
      %p152 = pneg %p77
      %p153 = pneg %p74
      %p154 = pneg %p103
      %p155 = pneg %p100
      %p156 = scmp.lt.s32.totalorder %s14, 1
      %s157 = scalar_select %p156, %s14, 1
      %s158 = smul.addr %s157, 32
      %s159 = smul.addr %s158, 4
      %s160 = scalar_lea.vmem %s3, %s159
      %p161 = scmp.lt.s32.totalorder %s14, 1
      %s162 = scalar_select %p161, %s14, 1
      %s163 = smul.addr %s162, 54
      %s164 = smul.addr %s163, 4
      %s165 = scalar_lea.vmem %s0, %s164
      %p166 = scmp.lt.s32.totalorder %s14, 1
      %s167 = scalar_select %p166, %s14, 1
      %s168 = smul.addr %s167, 32
      %s169 = smul.addr %s168, 4
      %s170 = scalar_lea.vmem %s3, %s169
      %v172 = vld [vmem:[%s165] sm:$0xf]
      %v173 = vld [vmem:[%s165 + $0x4] sm:$0xf]
      %v174 = vld [vmem:[%s165 + $0x8] sm:$0x1]
      %v175 = vld [vmem:[%s165 + $0xc] sm:$0xf]
      %v176 = vld [vmem:[%s165 + $0x10] sm:$0xf]
      %v177 = vld [vmem:[%s165 + $0x14] sm:$0x1]
      %v178 = vld [vmem:[%s165 + $0x18] sm:$0xf]
      %v179 = vld [vmem:[%s165 + $0x1c] sm:$0xf]
      %v180 = vld [vmem:[%s165 + $0x20] sm:$0x1]
      %v181 = vld [vmem:[%s165 + $0x24] sm:$0xf]
      %v182 = vld [vmem:[%s165 + $0x28] sm:$0xf]
      %v183 = vld [vmem:[%s165 + $0x2c] sm:$0x1]
      %v184 = vld [vmem:[%s165 + $0x30] sm:$0xf]
      %v185 = vld [vmem:[%s165 + $0x34] sm:$0xf]
      %v186 = vld [vmem:[%s165 + $0x38] sm:$0x1]
      %v187 = vld [vmem:[%s165 + $0x3c] sm:$0xf]
      %v188 = vld [vmem:[%s165 + $0x40] sm:$0xf]
      %v189 = vld [vmem:[%s165 + $0x44] sm:$0x1]
      %v190 = vld [vmem:[%s165 + $0x48] sm:$0xf]
      %v191 = vld [vmem:[%s165 + $0x4c] sm:$0xf]
      %v192 = vld [vmem:[%s165 + $0x50] sm:$0x1]
      %v193 = vld [vmem:[%s165 + $0x54] sm:$0xf]
      %v194 = vld [vmem:[%s165 + $0x58] sm:$0xf]
      %v195 = vld [vmem:[%s165 + $0x5c] sm:$0x1]
      %v196 = vld [vmem:[%s165 + $0x60] sm:$0xf]
      %v197 = vld [vmem:[%s165 + $0x64] sm:$0xf]
      %v198 = vld [vmem:[%s165 + $0x68] sm:$0x1]
      %v199 = vld [vmem:[%s165 + $0x6c] sm:$0xf]
      %v200 = vld [vmem:[%s165 + $0x70] sm:$0xf]
      %v201 = vld [vmem:[%s165 + $0x74] sm:$0x1]
      %v202 = vld [vmem:[%s165 + $0x78] sm:$0xf]
      %v203 = vld [vmem:[%s165 + $0x7c] sm:$0xf]
      %v204 = vld [vmem:[%s165 + $0x80] sm:$0x1]
      %v205 = vld [vmem:[%s165 + $0x84] sm:$0xf]
      %v206 = vld [vmem:[%s165 + $0x88] sm:$0xf]
      %v207 = vld [vmem:[%s165 + $0x8c] sm:$0x1]
      %v208 = vld [vmem:[%s165 + $0x90] sm:$0xf]
      %v209 = vld [vmem:[%s165 + $0x94] sm:$0xf]
      %v210 = vld [vmem:[%s165 + $0x98] sm:$0x1]
      %v211 = vld [vmem:[%s165 + $0x9c] sm:$0xf]
      %v212 = vld [vmem:[%s165 + $0xa0] sm:$0xf]
      %v213 = vld [vmem:[%s165 + $0xa4] sm:$0x1]
      %v214 = vld [vmem:[%s165 + $0xa8] sm:$0xf]
      %v215 = vld [vmem:[%s165 + $0xac] sm:$0xf]
      %v216 = vld [vmem:[%s165 + $0xb0] sm:$0x1]
      %v217 = vld [vmem:[%s165 + $0xb4] sm:$0xf]
      %v218 = vld [vmem:[%s165 + $0xb8] sm:$0xf]
      %v219 = vld [vmem:[%s165 + $0xbc] sm:$0x1]
      %v220 = vld [vmem:[%s165 + $0xc0] sm:$0xf]
      %v221 = vld [vmem:[%s165 + $0xc4] sm:$0xf]
      %v222 = vld [vmem:[%s165 + $0xc8] sm:$0x1]
      %v223 = vld [vmem:[%s165 + $0xcc] sm:$0xf]
      %v224 = vld [vmem:[%s165 + $0xd0] sm:$0xf]
      %v225 = vld [vmem:[%s165 + $0xd4] sm:$0x1]
      %v258 = vunpack.c.l.b16 %v172
      %v259 = vunpack.c.l.b16 %v173
      %v260 = vunpack.c.l.b16 %v175
      %v261 = vunpack.c.l.b16 %v176
      %v262 = vunpack.c.l.b16 %v178
      %v263 = vunpack.c.l.b16 %v179
      %v264 = vunpack.c.l.b16 %v181
      %v265 = vunpack.c.l.b16 %v182
      %v266 = vunpack.c.l.b16 %v184
      %v267 = vunpack.c.l.b16 %v185
      %v268 = vunpack.c.l.b16 %v187
      %v269 = vunpack.c.l.b16 %v188
      %v270 = vunpack.c.l.b16 %v190
      %v271 = vunpack.c.l.b16 %v191
      %v272 = vunpack.c.l.b16 %v193
      %v273 = vunpack.c.l.b16 %v194
      %v274 = vunpack.c.l.b16 %v196
      %v275 = vunpack.c.l.b16 %v197
      %v276 = vunpack.c.l.b16 %v199
      %v277 = vunpack.c.l.b16 %v200
      %v278 = vunpack.c.l.b16 %v202
      %v279 = vunpack.c.l.b16 %v203
      %v280 = vunpack.c.l.b16 %v205
      %v281 = vunpack.c.l.b16 %v206
      %v282 = vunpack.c.l.b16 %v208
      %v283 = vunpack.c.l.b16 %v209
      %v284 = vunpack.c.l.b16 %v211
      %v285 = vunpack.c.l.b16 %v212
      %v286 = vunpack.c.l.b16 %v214
      %v287 = vunpack.c.l.b16 %v215
      %v288 = vunpack.c.l.b16 %v217
      %v289 = vunpack.c.l.b16 %v218
      %v290 = vpack.c.b16 %v259, %v258
      %v291 = vpack.c.b16 %v261, %v260
      %v292 = vpack.c.b16 %v263, %v262
      %v293 = vpack.c.b16 %v265, %v264
      %v294 = vpack.c.b16 %v267, %v266
      %v295 = vpack.c.b16 %v269, %v268
      %v296 = vpack.c.b16 %v271, %v270
      %v297 = vpack.c.b16 %v273, %v272
      %v298 = vpack.c.b16 %v275, %v274
      %v299 = vpack.c.b16 %v277, %v276
      %v300 = vpack.c.b16 %v279, %v278
      %v301 = vpack.c.b16 %v281, %v280
      %v302 = vpack.c.b16 %v283, %v282
      %v303 = vpack.c.b16 %v285, %v284
      %v304 = vpack.c.b16 %v287, %v286
      %v305 = vpack.c.b16 %v289, %v288
      %vm322 = vcmask 31744
      %323 = vst.msk [vmem:[#allocation2] sm:$0xff] %vm322, %v290
      %324 = vst.msk [vmem:[#allocation2 + $0x8] sm:$0xff] %vm322, %v291
      %325 = vst.msk [vmem:[#allocation2 + $0x10] sm:$0xff] %vm322, %v292
      %326 = vst.msk [vmem:[#allocation2 + $0x18] sm:$0xff] %vm322, %v293
      %327 = vst.msk [vmem:[#allocation2 + $0x20] sm:$0xff] %vm322, %v294
      %328 = vst.msk [vmem:[#allocation2 + $0x28] sm:$0xff] %vm322, %v295
      %329 = vst.msk [vmem:[#allocation2 + $0x30] sm:$0xff] %vm322, %v296
      %330 = vst.msk [vmem:[#allocation2 + $0x38] sm:$0xff] %vm322, %v297
      %331 = vst.msk [vmem:[#allocation2 + $0x40] sm:$0xff] %vm322, %v298
      %332 = vst.msk [vmem:[#allocation2 + $0x48] sm:$0xff] %vm322, %v299
      %333 = vst.msk [vmem:[#allocation2 + $0x50] sm:$0xff] %vm322, %v300
      %334 = vst.msk [vmem:[#allocation2 + $0x58] sm:$0xff] %vm322, %v301
      %335 = vst.msk [vmem:[#allocation2 + $0x60] sm:$0xff] %vm322, %v302
      %336 = vst.msk [vmem:[#allocation2 + $0x68] sm:$0xff] %vm322, %v303
      %337 = vst.msk [vmem:[#allocation2 + $0x70] sm:$0xff] %vm322, %v304
      %338 = vst.msk [vmem:[#allocation2 + $0x78] sm:$0xff] %vm322, %v305
      %vm339 = vsmask.f32 3328
      %vm340 = vsmask.f32 7440
      %vm341 = vmor %vm339, %vm340
      %v343 = vshrl.u32 %v172, 16
      %v345 = vrot.slane %v343, 4
      %v346 = vshll.u32 %v172, 16
      %v348 = vrot.slane %v346, 5
      %v349 = vor.u32 %v345, %v348
      %v350 = vrot.slane %v349, 4
      %v352 = vshll.u32 %v173, 16
      %v354 = vrot.slane %v352, 5
      %v355 = vsel %vm341, %v350, %v354
      %v356 = vshrl.u32 %v173, 16
      %v358 = vrot.slane %v356, 4
      %v359 = vor.u32 %v358, %v354
      %v360 = vrot.slane %v359, 4
      %v362 = vshll.u32 %v174, 16
      %v364 = vrot.slane %v362, 5
      %v365 = vsel %vm341, %v360, %v364
      %v367 = vshrl.u32 %v175, 16
      %v369 = vrot.slane %v367, 4
      %v370 = vshll.u32 %v175, 16
      %v372 = vrot.slane %v370, 5
      %v373 = vor.u32 %v369, %v372
      %v374 = vrot.slane %v373, 4
      %v376 = vshll.u32 %v176, 16
      %v378 = vrot.slane %v376, 5
      %v379 = vsel %vm341, %v374, %v378
      %v380 = vshrl.u32 %v176, 16
      %v382 = vrot.slane %v380, 4
      %v383 = vor.u32 %v382, %v378
      %v384 = vrot.slane %v383, 4
      %v386 = vshll.u32 %v177, 16
      %v388 = vrot.slane %v386, 5
      %v389 = vsel %vm341, %v384, %v388
      %v391 = vshrl.u32 %v178, 16
      %v393 = vrot.slane %v391, 4
      %v394 = vshll.u32 %v178, 16
      %v396 = vrot.slane %v394, 5
      %v397 = vor.u32 %v393, %v396
      %v398 = vrot.slane %v397, 4
      %v400 = vshll.u32 %v179, 16
      %v402 = vrot.slane %v400, 5
      %v403 = vsel %vm341, %v398, %v402
      %v404 = vshrl.u32 %v179, 16
      %v406 = vrot.slane %v404, 4
      %v407 = vor.u32 %v406, %v402
      %v408 = vrot.slane %v407, 4
      %v410 = vshll.u32 %v180, 16
      %v412 = vrot.slane %v410, 5
      %v413 = vsel %vm341, %v408, %v412
      %v415 = vshrl.u32 %v181, 16
      %v417 = vrot.slane %v415, 4
      %v418 = vshll.u32 %v181, 16
      %v420 = vrot.slane %v418, 5
      %v421 = vor.u32 %v417, %v420
      %v422 = vrot.slane %v421, 4
      %v424 = vshll.u32 %v182, 16
      %v426 = vrot.slane %v424, 5
      %v427 = vsel %vm341, %v422, %v426
      %v428 = vshrl.u32 %v182, 16
      %v430 = vrot.slane %v428, 4
      %v431 = vor.u32 %v430, %v426
      %v432 = vrot.slane %v431, 4
      %v434 = vshll.u32 %v183, 16
      %v436 = vrot.slane %v434, 5
      %v437 = vsel %vm341, %v432, %v436
      %v439 = vshrl.u32 %v184, 16
      %v441 = vrot.slane %v439, 4
      %v442 = vshll.u32 %v184, 16
      %v444 = vrot.slane %v442, 5
      %v445 = vor.u32 %v441, %v444
      %v446 = vrot.slane %v445, 4
      %v448 = vshll.u32 %v185, 16
      %v450 = vrot.slane %v448, 5
      %v451 = vsel %vm341, %v446, %v450
      %v452 = vshrl.u32 %v185, 16
      %v454 = vrot.slane %v452, 4
      %v455 = vor.u32 %v454, %v450
      %v456 = vrot.slane %v455, 4
      %v458 = vshll.u32 %v186, 16
      %v460 = vrot.slane %v458, 5
      %v461 = vsel %vm341, %v456, %v460
      %v463 = vshrl.u32 %v187, 16
      %v465 = vrot.slane %v463, 4
      %v466 = vshll.u32 %v187, 16
      %v468 = vrot.slane %v466, 5
      %v469 = vor.u32 %v465, %v468
      %v470 = vrot.slane %v469, 4
      %v472 = vshll.u32 %v188, 16
      %v474 = vrot.slane %v472, 5
      %v475 = vsel %vm341, %v470, %v474
      %v476 = vshrl.u32 %v188, 16
      %v478 = vrot.slane %v476, 4
      %v479 = vor.u32 %v478, %v474
      %v480 = vrot.slane %v479, 4
      %v482 = vshll.u32 %v189, 16
      %v484 = vrot.slane %v482, 5
      %v485 = vsel %vm341, %v480, %v484
      %v487 = vshrl.u32 %v190, 16
      %v489 = vrot.slane %v487, 4
      %v490 = vshll.u32 %v190, 16
      %v492 = vrot.slane %v490, 5
      %v493 = vor.u32 %v489, %v492
      %v494 = vrot.slane %v493, 4
      %v496 = vshll.u32 %v191, 16
      %v498 = vrot.slane %v496, 5
      %v499 = vsel %vm341, %v494, %v498
      %v500 = vshrl.u32 %v191, 16
      %v502 = vrot.slane %v500, 4
      %v503 = vor.u32 %v502, %v498
      %v504 = vrot.slane %v503, 4
      %v506 = vshll.u32 %v192, 16
      %v508 = vrot.slane %v506, 5
      %v509 = vsel %vm341, %v504, %v508
      %v511 = vshrl.u32 %v193, 16
      %v513 = vrot.slane %v511, 4
      %v514 = vshll.u32 %v193, 16
      %v516 = vrot.slane %v514, 5
      %v517 = vor.u32 %v513, %v516
      %v518 = vrot.slane %v517, 4
      %v520 = vshll.u32 %v194, 16
      %v522 = vrot.slane %v520, 5
      %v523 = vsel %vm341, %v518, %v522
      %v524 = vshrl.u32 %v194, 16
      %v526 = vrot.slane %v524, 4
      %v527 = vor.u32 %v526, %v522
      %v528 = vrot.slane %v527, 4
      %v530 = vshll.u32 %v195, 16
      %v532 = vrot.slane %v530, 5
      %v533 = vsel %vm341, %v528, %v532
      %v535 = vshrl.u32 %v196, 16
      %v537 = vrot.slane %v535, 4
      %v538 = vshll.u32 %v196, 16
      %v540 = vrot.slane %v538, 5
      %v541 = vor.u32 %v537, %v540
      %v542 = vrot.slane %v541, 4
      %v544 = vshll.u32 %v197, 16
      %v546 = vrot.slane %v544, 5
      %v547 = vsel %vm341, %v542, %v546
      %v548 = vshrl.u32 %v197, 16
      %v550 = vrot.slane %v548, 4
      %v551 = vor.u32 %v550, %v546
      %v552 = vrot.slane %v551, 4
      %v554 = vshll.u32 %v198, 16
      %v556 = vrot.slane %v554, 5
      %v557 = vsel %vm341, %v552, %v556
      %v559 = vshrl.u32 %v199, 16
      %v561 = vrot.slane %v559, 4
      %v562 = vshll.u32 %v199, 16
      %v564 = vrot.slane %v562, 5
      %v565 = vor.u32 %v561, %v564
      %v566 = vrot.slane %v565, 4
      %v568 = vshll.u32 %v200, 16
      %v570 = vrot.slane %v568, 5
      %v571 = vsel %vm341, %v566, %v570
      %v572 = vshrl.u32 %v200, 16
      %v574 = vrot.slane %v572, 4
      %v575 = vor.u32 %v574, %v570
      %v576 = vrot.slane %v575, 4
      %v578 = vshll.u32 %v201, 16
      %v580 = vrot.slane %v578, 5
      %v581 = vsel %vm341, %v576, %v580
      %v583 = vshrl.u32 %v202, 16
      %v585 = vrot.slane %v583, 4
      %v586 = vshll.u32 %v202, 16
      %v588 = vrot.slane %v586, 5
      %v589 = vor.u32 %v585, %v588
      %v590 = vrot.slane %v589, 4
      %v592 = vshll.u32 %v203, 16
      %v594 = vrot.slane %v592, 5
      %v595 = vsel %vm341, %v590, %v594
      %v596 = vshrl.u32 %v203, 16
      %v598 = vrot.slane %v596, 4
      %v599 = vor.u32 %v598, %v594
      %v600 = vrot.slane %v599, 4
      %v602 = vshll.u32 %v204, 16
      %v604 = vrot.slane %v602, 5
      %v605 = vsel %vm341, %v600, %v604
      %v607 = vshrl.u32 %v205, 16
      %v609 = vrot.slane %v607, 4
      %v610 = vshll.u32 %v205, 16
      %v612 = vrot.slane %v610, 5
      %v613 = vor.u32 %v609, %v612
      %v614 = vrot.slane %v613, 4
      %v616 = vshll.u32 %v206, 16
      %v618 = vrot.slane %v616, 5
      %v619 = vsel %vm341, %v614, %v618
      %v620 = vshrl.u32 %v206, 16
      %v622 = vrot.slane %v620, 4
      %v623 = vor.u32 %v622, %v618
      %v624 = vrot.slane %v623, 4
      %v626 = vshll.u32 %v207, 16
      %v628 = vrot.slane %v626, 5
      %v629 = vsel %vm341, %v624, %v628
      %v631 = vshrl.u32 %v208, 16
      %v633 = vrot.slane %v631, 4
      %v634 = vshll.u32 %v208, 16
      %v636 = vrot.slane %v634, 5
      %v637 = vor.u32 %v633, %v636
      %v638 = vrot.slane %v637, 4
      %v640 = vshll.u32 %v209, 16
      %v642 = vrot.slane %v640, 5
      %v643 = vsel %vm341, %v638, %v642
      %v644 = vshrl.u32 %v209, 16
      %v646 = vrot.slane %v644, 4
      %v647 = vor.u32 %v646, %v642
      %v648 = vrot.slane %v647, 4
      %v650 = vshll.u32 %v210, 16
      %v652 = vrot.slane %v650, 5
      %v653 = vsel %vm341, %v648, %v652
      %v655 = vshrl.u32 %v211, 16
      %v657 = vrot.slane %v655, 4
      %v658 = vshll.u32 %v211, 16
      %v660 = vrot.slane %v658, 5
      %v661 = vor.u32 %v657, %v660
      %v662 = vrot.slane %v661, 4
      %v664 = vshll.u32 %v212, 16
      %v666 = vrot.slane %v664, 5
      %v667 = vsel %vm341, %v662, %v666
      %v668 = vshrl.u32 %v212, 16
      %v670 = vrot.slane %v668, 4
      %v671 = vor.u32 %v670, %v666
      %v672 = vrot.slane %v671, 4
      %v674 = vshll.u32 %v213, 16
      %v676 = vrot.slane %v674, 5
      %v677 = vsel %vm341, %v672, %v676
      %v679 = vshrl.u32 %v214, 16
      %v681 = vrot.slane %v679, 4
      %v682 = vshll.u32 %v214, 16
      %v684 = vrot.slane %v682, 5
      %v685 = vor.u32 %v681, %v684
      %v686 = vrot.slane %v685, 4
      %v688 = vshll.u32 %v215, 16
      %v690 = vrot.slane %v688, 5
      %v691 = vsel %vm341, %v686, %v690
      %v692 = vshrl.u32 %v215, 16
      %v694 = vrot.slane %v692, 4
      %v695 = vor.u32 %v694, %v690
      %v696 = vrot.slane %v695, 4
      %v698 = vshll.u32 %v216, 16
      %v700 = vrot.slane %v698, 5
      %v701 = vsel %vm341, %v696, %v700
      %v703 = vshrl.u32 %v217, 16
      %v705 = vrot.slane %v703, 4
      %v706 = vshll.u32 %v217, 16
      %v708 = vrot.slane %v706, 5
      %v709 = vor.u32 %v705, %v708
      %v710 = vrot.slane %v709, 4
      %v712 = vshll.u32 %v218, 16
      %v714 = vrot.slane %v712, 5
      %v715 = vsel %vm341, %v710, %v714
      %v716 = vshrl.u32 %v218, 16
      %v718 = vrot.slane %v716, 4
      %v719 = vor.u32 %v718, %v714
      %v720 = vrot.slane %v719, 4
      %v722 = vshll.u32 %v219, 16
      %v724 = vrot.slane %v722, 5
      %v725 = vsel %vm341, %v720, %v724
      %v726 = vunpack.c.l.b16 %v355
      %v727 = vunpack.c.l.b16 %v365
      %v728 = vunpack.c.l.b16 %v379
      %v729 = vunpack.c.l.b16 %v389
      %v730 = vunpack.c.l.b16 %v403
      %v731 = vunpack.c.l.b16 %v413
      %v732 = vunpack.c.l.b16 %v427
      %v733 = vunpack.c.l.b16 %v437
      %v734 = vunpack.c.l.b16 %v451
      %v735 = vunpack.c.l.b16 %v461
      %v736 = vunpack.c.l.b16 %v475
      %v737 = vunpack.c.l.b16 %v485
      %v738 = vunpack.c.l.b16 %v499
      %v739 = vunpack.c.l.b16 %v509
      %v740 = vunpack.c.l.b16 %v523
      %v741 = vunpack.c.l.b16 %v533
      %v742 = vunpack.c.l.b16 %v547
      %v743 = vunpack.c.l.b16 %v557
      %v744 = vunpack.c.l.b16 %v571
      %v745 = vunpack.c.l.b16 %v581
      %v746 = vunpack.c.l.b16 %v595
      %v747 = vunpack.c.l.b16 %v605
      %v748 = vunpack.c.l.b16 %v619
      %v749 = vunpack.c.l.b16 %v629
      %v750 = vunpack.c.l.b16 %v643
      %v751 = vunpack.c.l.b16 %v653
      %v752 = vunpack.c.l.b16 %v667
      %v753 = vunpack.c.l.b16 %v677
      %v754 = vunpack.c.l.b16 %v691
      %v755 = vunpack.c.l.b16 %v701
      %v756 = vunpack.c.l.b16 %v715
      %v757 = vunpack.c.l.b16 %v725
      %v758 = vpack.c.b16 %v727, %v726
      %v759 = vpack.c.b16 %v729, %v728
      %v760 = vpack.c.b16 %v731, %v730
      %v761 = vpack.c.b16 %v733, %v732
      %v762 = vpack.c.b16 %v735, %v734
      %v763 = vpack.c.b16 %v737, %v736
      %v764 = vpack.c.b16 %v739, %v738
      %v765 = vpack.c.b16 %v741, %v740
      %v766 = vpack.c.b16 %v743, %v742
      %v767 = vpack.c.b16 %v745, %v744
      %v768 = vpack.c.b16 %v747, %v746
      %v769 = vpack.c.b16 %v749, %v748
      %v770 = vpack.c.b16 %v751, %v750
      %v771 = vpack.c.b16 %v753, %v752
      %v772 = vpack.c.b16 %v755, %v754
      %v773 = vpack.c.b16 %v757, %v756
      %774 = vrot.lane.b32.xlu0 %v758, 4
      %v775 = vpop.permute.xlu0 %774
      %776 = vrot.lane.b32.xlu0 %v759, 4
      %v777 = vpop.permute.xlu0 %776
      %778 = vrot.lane.b32.xlu0 %v760, 4
      %v779 = vpop.permute.xlu0 %778
      %780 = vrot.lane.b32.xlu0 %v761, 4
      %v781 = vpop.permute.xlu0 %780
      %782 = vrot.lane.b32.xlu0 %v762, 4
      %v783 = vpop.permute.xlu0 %782
      %784 = vrot.lane.b32.xlu0 %v763, 4
      %v785 = vpop.permute.xlu0 %784
      %786 = vrot.lane.b32.xlu0 %v764, 4
      %v787 = vpop.permute.xlu0 %786
      %788 = vrot.lane.b32.xlu0 %v765, 4
      %v789 = vpop.permute.xlu0 %788
      %790 = vrot.lane.b32.xlu0 %v766, 4
      %v791 = vpop.permute.xlu0 %790
      %792 = vrot.lane.b32.xlu0 %v767, 4
      %v793 = vpop.permute.xlu0 %792
      %794 = vrot.lane.b32.xlu0 %v768, 4
      %v795 = vpop.permute.xlu0 %794
      %796 = vrot.lane.b32.xlu0 %v769, 4
      %v797 = vpop.permute.xlu0 %796
      %798 = vrot.lane.b32.xlu0 %v770, 4
      %v799 = vpop.permute.xlu0 %798
      %800 = vrot.lane.b32.xlu0 %v771, 4
      %v801 = vpop.permute.xlu0 %800
      %802 = vrot.lane.b32.xlu0 %v772, 4
      %v803 = vpop.permute.xlu0 %802
      %804 = vrot.lane.b32.xlu0 %v773, 4
      %v805 = vpop.permute.xlu0 %804
      %vm822 = vcmask 64544
      %823 = vst.msk [vmem:[#allocation2] sm:$0xff] %vm822, %v775
      %824 = vst.msk [vmem:[#allocation2 + $0x8] sm:$0xff] %vm822, %v777
      %825 = vst.msk [vmem:[#allocation2 + $0x10] sm:$0xff] %vm822, %v779
      %826 = vst.msk [vmem:[#allocation2 + $0x18] sm:$0xff] %vm822, %v781
      %827 = vst.msk [vmem:[#allocation2 + $0x20] sm:$0xff] %vm822, %v783
      %828 = vst.msk [vmem:[#allocation2 + $0x28] sm:$0xff] %vm822, %v785
      %829 = vst.msk [vmem:[#allocation2 + $0x30] sm:$0xff] %vm822, %v787
      %830 = vst.msk [vmem:[#allocation2 + $0x38] sm:$0xff] %vm822, %v789
      %831 = vst.msk [vmem:[#allocation2 + $0x40] sm:$0xff] %vm822, %v791
      %832 = vst.msk [vmem:[#allocation2 + $0x48] sm:$0xff] %vm822, %v793
      %833 = vst.msk [vmem:[#allocation2 + $0x50] sm:$0xff] %vm822, %v795
      %834 = vst.msk [vmem:[#allocation2 + $0x58] sm:$0xff] %vm822, %v797
      %835 = vst.msk [vmem:[#allocation2 + $0x60] sm:$0xff] %vm822, %v799
      %836 = vst.msk [vmem:[#allocation2 + $0x68] sm:$0xff] %vm822, %v801
      %837 = vst.msk [vmem:[#allocation2 + $0x70] sm:$0xff] %vm822, %v803
      %838 = vst.msk [vmem:[#allocation2 + $0x78] sm:$0xff] %vm822, %v805
      %vm855 = vcmask 1042432
      %vm856 = vcmask 1046532
      %vm857 = vmor %vm855, %vm856
      %v858 = vrot.slane %v172, 5
      %v859 = vrot.slane %v858, 4
      %v860 = vrot.slane %v173, 5
      %v861 = vsel %vm857, %v859, %v860
      %v862 = vrot.slane %v860, 4
      %v863 = vrot.slane %v174, 5
      %v864 = vsel %vm857, %v862, %v863
      %v865 = vrot.slane %v175, 5
      %v866 = vrot.slane %v865, 4
      %v867 = vrot.slane %v176, 5
      %v868 = vsel %vm857, %v866, %v867
      %v869 = vrot.slane %v867, 4
      %v870 = vrot.slane %v177, 5
      %v871 = vsel %vm857, %v869, %v870
      %v872 = vrot.slane %v178, 5
      %v873 = vrot.slane %v872, 4
      %v874 = vrot.slane %v179, 5
      %v875 = vsel %vm857, %v873, %v874
      %v876 = vrot.slane %v874, 4
      %v877 = vrot.slane %v180, 5
      %v878 = vsel %vm857, %v876, %v877
      %v879 = vrot.slane %v181, 5
      %v880 = vrot.slane %v879, 4
      %v881 = vrot.slane %v182, 5
      %v882 = vsel %vm857, %v880, %v881
      %v883 = vrot.slane %v881, 4
      %v884 = vrot.slane %v183, 5
      %v885 = vsel %vm857, %v883, %v884
      %v886 = vrot.slane %v184, 5
      %v887 = vrot.slane %v886, 4
      %v888 = vrot.slane %v185, 5
      %v889 = vsel %vm857, %v887, %v888
      %v890 = vrot.slane %v888, 4
      %v891 = vrot.slane %v186, 5
      %v892 = vsel %vm857, %v890, %v891
      %v893 = vrot.slane %v187, 5
      %v894 = vrot.slane %v893, 4
      %v895 = vrot.slane %v188, 5
      %v896 = vsel %vm857, %v894, %v895
      %v897 = vrot.slane %v895, 4
      %v898 = vrot.slane %v189, 5
      %v899 = vsel %vm857, %v897, %v898
      %v900 = vrot.slane %v190, 5
      %v901 = vrot.slane %v900, 4
      %v902 = vrot.slane %v191, 5
      %v903 = vsel %vm857, %v901, %v902
      %v904 = vrot.slane %v902, 4
      %v905 = vrot.slane %v192, 5
      %v906 = vsel %vm857, %v904, %v905
      %v907 = vrot.slane %v193, 5
      %v908 = vrot.slane %v907, 4
      %v909 = vrot.slane %v194, 5
      %v910 = vsel %vm857, %v908, %v909
      %v911 = vrot.slane %v909, 4
      %v912 = vrot.slane %v195, 5
      %v913 = vsel %vm857, %v911, %v912
      %v914 = vrot.slane %v196, 5
      %v915 = vrot.slane %v914, 4
      %v916 = vrot.slane %v197, 5
      %v917 = vsel %vm857, %v915, %v916
      %v918 = vrot.slane %v916, 4
      %v919 = vrot.slane %v198, 5
      %v920 = vsel %vm857, %v918, %v919
      %v921 = vrot.slane %v199, 5
      %v922 = vrot.slane %v921, 4
      %v923 = vrot.slane %v200, 5
      %v924 = vsel %vm857, %v922, %v923
      %v925 = vrot.slane %v923, 4
      %v926 = vrot.slane %v201, 5
      %v927 = vsel %vm857, %v925, %v926
      %v928 = vrot.slane %v202, 5
      %v929 = vrot.slane %v928, 4
      %v930 = vrot.slane %v203, 5
      %v931 = vsel %vm857, %v929, %v930
      %v932 = vrot.slane %v930, 4
      %v933 = vrot.slane %v204, 5
      %v934 = vsel %vm857, %v932, %v933
      %v935 = vrot.slane %v205, 5
      %v936 = vrot.slane %v935, 4
      %v937 = vrot.slane %v206, 5
      %v938 = vsel %vm857, %v936, %v937
      %v939 = vrot.slane %v937, 4
      %v940 = vrot.slane %v207, 5
      %v941 = vsel %vm857, %v939, %v940
      %v942 = vrot.slane %v208, 5
      %v943 = vrot.slane %v942, 4
      %v944 = vrot.slane %v209, 5
      %v945 = vsel %vm857, %v943, %v944
      %v946 = vrot.slane %v944, 4
      %v947 = vrot.slane %v210, 5
      %v948 = vsel %vm857, %v946, %v947
      %v949 = vrot.slane %v211, 5
      %v950 = vrot.slane %v949, 4
      %v951 = vrot.slane %v212, 5
      %v952 = vsel %vm857, %v950, %v951
      %v953 = vrot.slane %v951, 4
      %v954 = vrot.slane %v213, 5
      %v955 = vsel %vm857, %v953, %v954
      %v956 = vrot.slane %v214, 5
      %v957 = vrot.slane %v956, 4
      %v958 = vrot.slane %v215, 5
      %v959 = vsel %vm857, %v957, %v958
      %v960 = vrot.slane %v958, 4
      %v961 = vrot.slane %v216, 5
      %v962 = vsel %vm857, %v960, %v961
      %v963 = vrot.slane %v217, 5
      %v964 = vrot.slane %v963, 4
      %v965 = vrot.slane %v218, 5
      %v966 = vsel %vm857, %v964, %v965
      %v967 = vrot.slane %v965, 4
      %v968 = vrot.slane %v219, 5
      %v969 = vsel %vm857, %v967, %v968
      %v970 = vunpack.c.l.b16 %v861
      %v971 = vunpack.c.l.b16 %v864
      %v972 = vunpack.c.l.b16 %v868
      %v973 = vunpack.c.l.b16 %v871
      %v974 = vunpack.c.l.b16 %v875
      %v975 = vunpack.c.l.b16 %v878
      %v976 = vunpack.c.l.b16 %v882
      %v977 = vunpack.c.l.b16 %v885
      %v978 = vunpack.c.l.b16 %v889
      %v979 = vunpack.c.l.b16 %v892
      %v980 = vunpack.c.l.b16 %v896
      %v981 = vunpack.c.l.b16 %v899
      %v982 = vunpack.c.l.b16 %v903
      %v983 = vunpack.c.l.b16 %v906
      %v984 = vunpack.c.l.b16 %v910
      %v985 = vunpack.c.l.b16 %v913
      %v986 = vunpack.c.l.b16 %v917
      %v987 = vunpack.c.l.b16 %v920
      %v988 = vunpack.c.l.b16 %v924
      %v989 = vunpack.c.l.b16 %v927
      %v990 = vunpack.c.l.b16 %v931
      %v991 = vunpack.c.l.b16 %v934
      %v992 = vunpack.c.l.b16 %v938
      %v993 = vunpack.c.l.b16 %v941
      %v994 = vunpack.c.l.b16 %v945
      %v995 = vunpack.c.l.b16 %v948
      %v996 = vunpack.c.l.b16 %v952
      %v997 = vunpack.c.l.b16 %v955
      %v998 = vunpack.c.l.b16 %v959
      %v999 = vunpack.c.l.b16 %v962
      %v1000 = vunpack.c.l.b16 %v966
      %v1001 = vunpack.c.l.b16 %v969
      %v1002 = vpack.c.b16 %v971, %v970
      %v1003 = vpack.c.b16 %v973, %v972
      %v1004 = vpack.c.b16 %v975, %v974
      %v1005 = vpack.c.b16 %v977, %v976
      %v1006 = vpack.c.b16 %v979, %v978
      %v1007 = vpack.c.b16 %v981, %v980
      %v1008 = vpack.c.b16 %v983, %v982
      %v1009 = vpack.c.b16 %v985, %v984
      %v1010 = vpack.c.b16 %v987, %v986
      %v1011 = vpack.c.b16 %v989, %v988
      %v1012 = vpack.c.b16 %v991, %v990
      %v1013 = vpack.c.b16 %v993, %v992
      %v1014 = vpack.c.b16 %v995, %v994
      %v1015 = vpack.c.b16 %v997, %v996
      %v1016 = vpack.c.b16 %v999, %v998
      %v1017 = vpack.c.b16 %v1001, %v1000
      %1018 = vrot.lane.b32.xlu0 %v1002, 8
      %v1019 = vpop.permute.xlu0 %1018
      %1020 = vrot.lane.b32.xlu0 %v1003, 8
      %v1021 = vpop.permute.xlu0 %1020
      %1022 = vrot.lane.b32.xlu0 %v1004, 8
      %v1023 = vpop.permute.xlu0 %1022
      %1024 = vrot.lane.b32.xlu0 %v1005, 8
      %v1025 = vpop.permute.xlu0 %1024
      %1026 = vrot.lane.b32.xlu0 %v1006, 8
      %v1027 = vpop.permute.xlu0 %1026
      %1028 = vrot.lane.b32.xlu0 %v1007, 8
      %v1029 = vpop.permute.xlu0 %1028
      %1030 = vrot.lane.b32.xlu0 %v1008, 8
      %v1031 = vpop.permute.xlu0 %1030
      %1032 = vrot.lane.b32.xlu0 %v1009, 8
      %v1033 = vpop.permute.xlu0 %1032
      %1034 = vrot.lane.b32.xlu0 %v1010, 8
      %v1035 = vpop.permute.xlu0 %1034
      %1036 = vrot.lane.b32.xlu0 %v1011, 8
      %v1037 = vpop.permute.xlu0 %1036
      %1038 = vrot.lane.b32.xlu0 %v1012, 8
      %v1039 = vpop.permute.xlu0 %1038
      %1040 = vrot.lane.b32.xlu0 %v1013, 8
      %v1041 = vpop.permute.xlu0 %1040
      %1042 = vrot.lane.b32.xlu0 %v1014, 8
      %v1043 = vpop.permute.xlu0 %1042
      %1044 = vrot.lane.b32.xlu0 %v1015, 8
      %v1045 = vpop.permute.xlu0 %1044
      %1046 = vrot.lane.b32.xlu0 %v1016, 8
      %v1047 = vpop.permute.xlu0 %1046
      %1048 = vrot.lane.b32.xlu0 %v1017, 8
      %v1049 = vpop.permute.xlu0 %1048
      %vm1066 = vcmask 97344
      %1067 = vst.msk [vmem:[#allocation2] sm:$0xff] %vm1066, %v1019
      %1068 = vst.msk [vmem:[#allocation2 + $0x8] sm:$0xff] %vm1066, %v1021
      %1069 = vst.msk [vmem:[#allocation2 + $0x10] sm:$0xff] %vm1066, %v1023
      %1070 = vst.msk [vmem:[#allocation2 + $0x18] sm:$0xff] %vm1066, %v1025
      %1071 = vst.msk [vmem:[#allocation2 + $0x20] sm:$0xff] %vm1066, %v1027
      %1072 = vst.msk [vmem:[#allocation2 + $0x28] sm:$0xff] %vm1066, %v1029
      %1073 = vst.msk [vmem:[#allocation2 + $0x30] sm:$0xff] %vm1066, %v1031
      %1074 = vst.msk [vmem:[#allocation2 + $0x38] sm:$0xff] %vm1066, %v1033
      %1075 = vst.msk [vmem:[#allocation2 + $0x40] sm:$0xff] %vm1066, %v1035
      %1076 = vst.msk [vmem:[#allocation2 + $0x48] sm:$0xff] %vm1066, %v1037
      %1077 = vst.msk [vmem:[#allocation2 + $0x50] sm:$0xff] %vm1066, %v1039
      %1078 = vst.msk [vmem:[#allocation2 + $0x58] sm:$0xff] %vm1066, %v1041
      %1079 = vst.msk [vmem:[#allocation2 + $0x60] sm:$0xff] %vm1066, %v1043
      %1080 = vst.msk [vmem:[#allocation2 + $0x68] sm:$0xff] %vm1066, %v1045
      %1081 = vst.msk [vmem:[#allocation2 + $0x70] sm:$0xff] %vm1066, %v1047
      %1082 = vst.msk [vmem:[#allocation2 + $0x78] sm:$0xff] %vm1066, %v1049
      %v1085 = vunpack.c.l.b16 %v220
      %v1086 = vunpack.c.l.b16 %v221
      %v1087 = vpack.c.b16 %v1086, %v1085
      %1088 = vrot.lane.b32.xlu0 %v291, 12
      %v1089 = vpop.permute.xlu0 %1088
      %1090 = vrot.lane.b32.xlu0 %v292, 12
      %v1091 = vpop.permute.xlu0 %1090
      %1092 = vrot.lane.b32.xlu0 %v293, 12
      %v1093 = vpop.permute.xlu0 %1092
      %1094 = vrot.lane.b32.xlu0 %v294, 12
      %v1095 = vpop.permute.xlu0 %1094
      %1096 = vrot.lane.b32.xlu0 %v295, 12
      %v1097 = vpop.permute.xlu0 %1096
      %1098 = vrot.lane.b32.xlu0 %v296, 12
      %v1099 = vpop.permute.xlu0 %1098
      %1100 = vrot.lane.b32.xlu0 %v297, 12
      %v1101 = vpop.permute.xlu0 %1100
      %1102 = vrot.lane.b32.xlu0 %v298, 12
      %v1103 = vpop.permute.xlu0 %1102
      %1104 = vrot.lane.b32.xlu0 %v299, 12
      %v1105 = vpop.permute.xlu0 %1104
      %1106 = vrot.lane.b32.xlu0 %v300, 12
      %v1107 = vpop.permute.xlu0 %1106
      %1108 = vrot.lane.b32.xlu0 %v301, 12
      %v1109 = vpop.permute.xlu0 %1108
      %1110 = vrot.lane.b32.xlu0 %v302, 12
      %v1111 = vpop.permute.xlu0 %1110
      %1112 = vrot.lane.b32.xlu0 %v303, 12
      %v1113 = vpop.permute.xlu0 %1112
      %1114 = vrot.lane.b32.xlu0 %v304, 12
      %v1115 = vpop.permute.xlu0 %1114
      %1116 = vrot.lane.b32.xlu0 %v305, 12
      %v1117 = vpop.permute.xlu0 %1116
      %1118 = vrot.lane.b32.xlu0 %v1087, 12
      %v1119 = vpop.permute.xlu0 %1118
      %vm1136 = vcmask 130144
      %1137 = vst.msk [vmem:[#allocation2] sm:$0xff] %vm1136, %v1089
      %1138 = vst.msk [vmem:[#allocation2 + $0x8] sm:$0xff] %vm1136, %v1091
      %1139 = vst.msk [vmem:[#allocation2 + $0x10] sm:$0xff] %vm1136, %v1093
      %1140 = vst.msk [vmem:[#allocation2 + $0x18] sm:$0xff] %vm1136, %v1095
      %1141 = vst.msk [vmem:[#allocation2 + $0x20] sm:$0xff] %vm1136, %v1097
      %1142 = vst.msk [vmem:[#allocation2 + $0x28] sm:$0xff] %vm1136, %v1099
      %1143 = vst.msk [vmem:[#allocation2 + $0x30] sm:$0xff] %vm1136, %v1101
      %1144 = vst.msk [vmem:[#allocation2 + $0x38] sm:$0xff] %vm1136, %v1103
      %1145 = vst.msk [vmem:[#allocation2 + $0x40] sm:$0xff] %vm1136, %v1105
      %1146 = vst.msk [vmem:[#allocation2 + $0x48] sm:$0xff] %vm1136, %v1107
      %1147 = vst.msk [vmem:[#allocation2 + $0x50] sm:$0xff] %vm1136, %v1109
      %1148 = vst.msk [vmem:[#allocation2 + $0x58] sm:$0xff] %vm1136, %v1111
      %1149 = vst.msk [vmem:[#allocation2 + $0x60] sm:$0xff] %vm1136, %v1113
      %1150 = vst.msk [vmem:[#allocation2 + $0x68] sm:$0xff] %vm1136, %v1115
      %1151 = vst.msk [vmem:[#allocation2 + $0x70] sm:$0xff] %vm1136, %v1117
      %1152 = vst.msk [vmem:[#allocation2 + $0x78] sm:$0xff] %vm1136, %v1119
      %v1154 = vshrl.u32 %v220, 16
      %v1156 = vrot.slane %v1154, 4
      %v1157 = vshll.u32 %v220, 16
      %v1159 = vrot.slane %v1157, 5
      %v1160 = vor.u32 %v1156, %v1159
      %v1161 = vrot.slane %v1160, 4
      %v1163 = vshll.u32 %v221, 16
      %v1165 = vrot.slane %v1163, 5
      %v1166 = vsel %vm341, %v1161, %v1165
      %v1167 = vshrl.u32 %v221, 16
      %v1169 = vrot.slane %v1167, 4
      %v1170 = vor.u32 %v1169, %v1165
      %v1171 = vrot.slane %v1170, 4
      %v1173 = vshll.u32 %v222, 16
      %v1175 = vrot.slane %v1173, 5
      %v1176 = vsel %vm341, %v1171, %v1175
      %v1177 = vunpack.c.l.b16 %v1166
      %v1178 = vunpack.c.l.b16 %v1176
      %v1179 = vpack.c.b16 %v1178, %v1177
      %1180 = vrot.lane.b32.xlu0 %v759, 16
      %v1181 = vpop.permute.xlu0 %1180
      %1182 = vrot.lane.b32.xlu0 %v760, 16
      %v1183 = vpop.permute.xlu0 %1182
      %1184 = vrot.lane.b32.xlu0 %v761, 16
      %v1185 = vpop.permute.xlu0 %1184
      %1186 = vrot.lane.b32.xlu0 %v762, 16
      %v1187 = vpop.permute.xlu0 %1186
      %1188 = vrot.lane.b32.xlu0 %v763, 16
      %v1189 = vpop.permute.xlu0 %1188
      %1190 = vrot.lane.b32.xlu0 %v764, 16
      %v1191 = vpop.permute.xlu0 %1190
      %1192 = vrot.lane.b32.xlu0 %v765, 16
      %v1193 = vpop.permute.xlu0 %1192
      %1194 = vrot.lane.b32.xlu0 %v766, 16
      %v1195 = vpop.permute.xlu0 %1194
      %1196 = vrot.lane.b32.xlu0 %v767, 16
      %v1197 = vpop.permute.xlu0 %1196
      %1198 = vrot.lane.b32.xlu0 %v768, 16
      %v1199 = vpop.permute.xlu0 %1198
      %1200 = vrot.lane.b32.xlu0 %v769, 16
      %v1201 = vpop.permute.xlu0 %1200
      %1202 = vrot.lane.b32.xlu0 %v770, 16
      %v1203 = vpop.permute.xlu0 %1202
      %1204 = vrot.lane.b32.xlu0 %v771, 16
      %v1205 = vpop.permute.xlu0 %1204
      %1206 = vrot.lane.b32.xlu0 %v772, 16
      %v1207 = vpop.permute.xlu0 %1206
      %1208 = vrot.lane.b32.xlu0 %v773, 16
      %v1209 = vpop.permute.xlu0 %1208
      %1210 = vrot.lane.b32.xlu0 %v1179, 16
      %v1211 = vpop.permute.xlu0 %1210
      %vm1228 = vcmask 162944
      %1229 = vst.msk [vmem:[#allocation2] sm:$0xff] %vm1228, %v1181
      %1230 = vst.msk [vmem:[#allocation2 + $0x8] sm:$0xff] %vm1228, %v1183
      %1231 = vst.msk [vmem:[#allocation2 + $0x10] sm:$0xff] %vm1228, %v1185
      %1232 = vst.msk [vmem:[#allocation2 + $0x18] sm:$0xff] %vm1228, %v1187
      %1233 = vst.msk [vmem:[#allocation2 + $0x20] sm:$0xff] %vm1228, %v1189
      %1234 = vst.msk [vmem:[#allocation2 + $0x28] sm:$0xff] %vm1228, %v1191
      %1235 = vst.msk [vmem:[#allocation2 + $0x30] sm:$0xff] %vm1228, %v1193
      %1236 = vst.msk [vmem:[#allocation2 + $0x38] sm:$0xff] %vm1228, %v1195
      %1237 = vst.msk [vmem:[#allocation2 + $0x40] sm:$0xff] %vm1228, %v1197
      %1238 = vst.msk [vmem:[#allocation2 + $0x48] sm:$0xff] %vm1228, %v1199
      %1239 = vst.msk [vmem:[#allocation2 + $0x50] sm:$0xff] %vm1228, %v1201
      %1240 = vst.msk [vmem:[#allocation2 + $0x58] sm:$0xff] %vm1228, %v1203
      %1241 = vst.msk [vmem:[#allocation2 + $0x60] sm:$0xff] %vm1228, %v1205
      %1242 = vst.msk [vmem:[#allocation2 + $0x68] sm:$0xff] %vm1228, %v1207
      %1243 = vst.msk [vmem:[#allocation2 + $0x70] sm:$0xff] %vm1228, %v1209
      %1244 = vst.msk [vmem:[#allocation2 + $0x78] sm:$0xff] %vm1228, %v1211
      %v1246 = vrot.slane %v220, 5
      %v1247 = vrot.slane %v1246, 4
      %v1248 = vrot.slane %v221, 5
      %v1249 = vsel %vm857, %v1247, %v1248
      %v1250 = vrot.slane %v1248, 4
      %v1251 = vrot.slane %v222, 5
      %v1252 = vsel %vm857, %v1250, %v1251
      %v1253 = vunpack.c.l.b16 %v1249
      %v1254 = vunpack.c.l.b16 %v1252
      %v1255 = vpack.c.b16 %v1254, %v1253
      %1256 = vrot.lane.b32.xlu0 %v1003, 20
      %v1257 = vpop.permute.xlu0 %1256
      %1258 = vrot.lane.b32.xlu0 %v1004, 20
      %v1259 = vpop.permute.xlu0 %1258
      %1260 = vrot.lane.b32.xlu0 %v1005, 20
      %v1261 = vpop.permute.xlu0 %1260
      %1262 = vrot.lane.b32.xlu0 %v1006, 20
      %v1263 = vpop.permute.xlu0 %1262
      %1264 = vrot.lane.b32.xlu0 %v1007, 20
      %v1265 = vpop.permute.xlu0 %1264
      %1266 = vrot.lane.b32.xlu0 %v1008, 20
      %v1267 = vpop.permute.xlu0 %1266
      %1268 = vrot.lane.b32.xlu0 %v1009, 20
      %v1269 = vpop.permute.xlu0 %1268
      %1270 = vrot.lane.b32.xlu0 %v1010, 20
      %v1271 = vpop.permute.xlu0 %1270
      %1272 = vrot.lane.b32.xlu0 %v1011, 20
      %v1273 = vpop.permute.xlu0 %1272
      %1274 = vrot.lane.b32.xlu0 %v1012, 20
      %v1275 = vpop.permute.xlu0 %1274
      %1276 = vrot.lane.b32.xlu0 %v1013, 20
      %v1277 = vpop.permute.xlu0 %1276
      %1278 = vrot.lane.b32.xlu0 %v1014, 20
      %v1279 = vpop.permute.xlu0 %1278
      %1280 = vrot.lane.b32.xlu0 %v1015, 20
      %v1281 = vpop.permute.xlu0 %1280
      %1282 = vrot.lane.b32.xlu0 %v1016, 20
      %v1283 = vpop.permute.xlu0 %1282
      %1284 = vrot.lane.b32.xlu0 %v1017, 20
      %v1285 = vpop.permute.xlu0 %1284
      %1286 = vrot.lane.b32.xlu0 %v1255, 20
      %v1287 = vpop.permute.xlu0 %1286
      %vm1304 = vcmask 195744
      %1305 = vst.msk [vmem:[#allocation2] sm:$0xff] %vm1304, %v1257
      %1306 = vst.msk [vmem:[#allocation2 + $0x8] sm:$0xff] %vm1304, %v1259
      %1307 = vst.msk [vmem:[#allocation2 + $0x10] sm:$0xff] %vm1304, %v1261
      %1308 = vst.msk [vmem:[#allocation2 + $0x18] sm:$0xff] %vm1304, %v1263
      %1309 = vst.msk [vmem:[#allocation2 + $0x20] sm:$0xff] %vm1304, %v1265
      %1310 = vst.msk [vmem:[#allocation2 + $0x28] sm:$0xff] %vm1304, %v1267
      %1311 = vst.msk [vmem:[#allocation2 + $0x30] sm:$0xff] %vm1304, %v1269
      %1312 = vst.msk [vmem:[#allocation2 + $0x38] sm:$0xff] %vm1304, %v1271
      %1313 = vst.msk [vmem:[#allocation2 + $0x40] sm:$0xff] %vm1304, %v1273
      %1314 = vst.msk [vmem:[#allocation2 + $0x48] sm:$0xff] %vm1304, %v1275
      %1315 = vst.msk [vmem:[#allocation2 + $0x50] sm:$0xff] %vm1304, %v1277
      %1316 = vst.msk [vmem:[#allocation2 + $0x58] sm:$0xff] %vm1304, %v1279
      %1317 = vst.msk [vmem:[#allocation2 + $0x60] sm:$0xff] %vm1304, %v1281
      %1318 = vst.msk [vmem:[#allocation2 + $0x68] sm:$0xff] %vm1304, %v1283
      %1319 = vst.msk [vmem:[#allocation2 + $0x70] sm:$0xff] %vm1304, %v1285
      %1320 = vst.msk [vmem:[#allocation2 + $0x78] sm:$0xff] %vm1304, %v1287
      %v1323 = vunpack.c.l.b16 %v223
      %v1324 = vunpack.c.l.b16 %v224
      %v1325 = vpack.c.b16 %v1324, %v1323
      %1326 = vrot.lane.b32.xlu0 %v292, 24
      %v1327 = vpop.permute.xlu0 %1326
      %1328 = vrot.lane.b32.xlu0 %v293, 24
      %v1329 = vpop.permute.xlu0 %1328
      %1330 = vrot.lane.b32.xlu0 %v294, 24
      %v1331 = vpop.permute.xlu0 %1330
      %1332 = vrot.lane.b32.xlu0 %v295, 24
      %v1333 = vpop.permute.xlu0 %1332
      %1334 = vrot.lane.b32.xlu0 %v296, 24
      %v1335 = vpop.permute.xlu0 %1334
      %1336 = vrot.lane.b32.xlu0 %v297, 24
      %v1337 = vpop.permute.xlu0 %1336
      %1338 = vrot.lane.b32.xlu0 %v298, 24
      %v1339 = vpop.permute.xlu0 %1338
      %1340 = vrot.lane.b32.xlu0 %v299, 24
      %v1341 = vpop.permute.xlu0 %1340
      %1342 = vrot.lane.b32.xlu0 %v300, 24
      %v1343 = vpop.permute.xlu0 %1342
      %1344 = vrot.lane.b32.xlu0 %v301, 24
      %v1345 = vpop.permute.xlu0 %1344
      %1346 = vrot.lane.b32.xlu0 %v302, 24
      %v1347 = vpop.permute.xlu0 %1346
      %1348 = vrot.lane.b32.xlu0 %v303, 24
      %v1349 = vpop.permute.xlu0 %1348
      %1350 = vrot.lane.b32.xlu0 %v304, 24
      %v1351 = vpop.permute.xlu0 %1350
      %1352 = vrot.lane.b32.xlu0 %v305, 24
      %v1353 = vpop.permute.xlu0 %1352
      %1354 = vrot.lane.b32.xlu0 %v1087, 24
      %v1355 = vpop.permute.xlu0 %1354
      %1356 = vrot.lane.b32.xlu0 %v1325, 24
      %v1357 = vpop.permute.xlu0 %1356
      %vm1374 = vcmask 228544
      %1375 = vst.msk [vmem:[#allocation2] sm:$0xff] %vm1374, %v1327
      %1376 = vst.msk [vmem:[#allocation2 + $0x8] sm:$0xff] %vm1374, %v1329
      %1377 = vst.msk [vmem:[#allocation2 + $0x10] sm:$0xff] %vm1374, %v1331
      %1378 = vst.msk [vmem:[#allocation2 + $0x18] sm:$0xff] %vm1374, %v1333
      %1379 = vst.msk [vmem:[#allocation2 + $0x20] sm:$0xff] %vm1374, %v1335
      %1380 = vst.msk [vmem:[#allocation2 + $0x28] sm:$0xff] %vm1374, %v1337
      %1381 = vst.msk [vmem:[#allocation2 + $0x30] sm:$0xff] %vm1374, %v1339
      %1382 = vst.msk [vmem:[#allocation2 + $0x38] sm:$0xff] %vm1374, %v1341
      %1383 = vst.msk [vmem:[#allocation2 + $0x40] sm:$0xff] %vm1374, %v1343
      %1384 = vst.msk [vmem:[#allocation2 + $0x48] sm:$0xff] %vm1374, %v1345
      %1385 = vst.msk [vmem:[#allocation2 + $0x50] sm:$0xff] %vm1374, %v1347
      %1386 = vst.msk [vmem:[#allocation2 + $0x58] sm:$0xff] %vm1374, %v1349
      %1387 = vst.msk [vmem:[#allocation2 + $0x60] sm:$0xff] %vm1374, %v1351
      %1388 = vst.msk [vmem:[#allocation2 + $0x68] sm:$0xff] %vm1374, %v1353
      %1389 = vst.msk [vmem:[#allocation2 + $0x70] sm:$0xff] %vm1374, %v1355
      %1390 = vst.msk [vmem:[#allocation2 + $0x78] sm:$0xff] %vm1374, %v1357
      %v1392 = vshrl.u32 %v223, 16
      %v1394 = vrot.slane %v1392, 4
      %v1395 = vshll.u32 %v223, 16
      %v1397 = vrot.slane %v1395, 5
      %v1398 = vor.u32 %v1394, %v1397
      %v1399 = vrot.slane %v1398, 4
      %v1401 = vshll.u32 %v224, 16
      %v1403 = vrot.slane %v1401, 5
      %v1404 = vsel %vm341, %v1399, %v1403
      %v1405 = vshrl.u32 %v224, 16
      %v1407 = vrot.slane %v1405, 4
      %v1408 = vor.u32 %v1407, %v1403
      %v1409 = vrot.slane %v1408, 4
      %v1411 = vshll.u32 %v225, 16
      %v1413 = vrot.slane %v1411, 5
      %v1414 = vsel %vm341, %v1409, %v1413
      %v1415 = vunpack.c.l.b16 %v1404
      %v1416 = vunpack.c.l.b16 %v1414
      %v1417 = vpack.c.b16 %v1416, %v1415
      %1418 = vrot.lane.b32.xlu0 %v760, 28
      %v1419 = vpop.permute.xlu0 %1418
      %1420 = vrot.lane.b32.xlu0 %v761, 28
      %v1421 = vpop.permute.xlu0 %1420
      %1422 = vrot.lane.b32.xlu0 %v762, 28
      %v1423 = vpop.permute.xlu0 %1422
      %1424 = vrot.lane.b32.xlu0 %v763, 28
      %v1425 = vpop.permute.xlu0 %1424
      %1426 = vrot.lane.b32.xlu0 %v764, 28
      %v1427 = vpop.permute.xlu0 %1426
      %1428 = vrot.lane.b32.xlu0 %v765, 28
      %v1429 = vpop.permute.xlu0 %1428
      %1430 = vrot.lane.b32.xlu0 %v766, 28
      %v1431 = vpop.permute.xlu0 %1430
      %1432 = vrot.lane.b32.xlu0 %v767, 28
      %v1433 = vpop.permute.xlu0 %1432
      %1434 = vrot.lane.b32.xlu0 %v768, 28
      %v1435 = vpop.permute.xlu0 %1434
      %1436 = vrot.lane.b32.xlu0 %v769, 28
      %v1437 = vpop.permute.xlu0 %1436
      %1438 = vrot.lane.b32.xlu0 %v770, 28
      %v1439 = vpop.permute.xlu0 %1438
      %1440 = vrot.lane.b32.xlu0 %v771, 28
      %v1441 = vpop.permute.xlu0 %1440
      %1442 = vrot.lane.b32.xlu0 %v772, 28
      %v1443 = vpop.permute.xlu0 %1442
      %1444 = vrot.lane.b32.xlu0 %v773, 28
      %v1445 = vpop.permute.xlu0 %1444
      %1446 = vrot.lane.b32.xlu0 %v1179, 28
      %v1447 = vpop.permute.xlu0 %1446
      %1448 = vrot.lane.b32.xlu0 %v1417, 28
      %v1449 = vpop.permute.xlu0 %1448
      %vm1466 = vcmask 261344
      %1467 = vst.msk [vmem:[#allocation2] sm:$0xff] %vm1466, %v1419
      %1468 = vst.msk [vmem:[#allocation2 + $0x8] sm:$0xff] %vm1466, %v1421
      %1469 = vst.msk [vmem:[#allocation2 + $0x10] sm:$0xff] %vm1466, %v1423
      %1470 = vst.msk [vmem:[#allocation2 + $0x18] sm:$0xff] %vm1466, %v1425
      %1471 = vst.msk [vmem:[#allocation2 + $0x20] sm:$0xff] %vm1466, %v1427
      %1472 = vst.msk [vmem:[#allocation2 + $0x28] sm:$0xff] %vm1466, %v1429
      %1473 = vst.msk [vmem:[#allocation2 + $0x30] sm:$0xff] %vm1466, %v1431
      %1474 = vst.msk [vmem:[#allocation2 + $0x38] sm:$0xff] %vm1466, %v1433
      %1475 = vst.msk [vmem:[#allocation2 + $0x40] sm:$0xff] %vm1466, %v1435
      %1476 = vst.msk [vmem:[#allocation2 + $0x48] sm:$0xff] %vm1466, %v1437
      %1477 = vst.msk [vmem:[#allocation2 + $0x50] sm:$0xff] %vm1466, %v1439
      %1478 = vst.msk [vmem:[#allocation2 + $0x58] sm:$0xff] %vm1466, %v1441
      %1479 = vst.msk [vmem:[#allocation2 + $0x60] sm:$0xff] %vm1466, %v1443
      %1480 = vst.msk [vmem:[#allocation2 + $0x68] sm:$0xff] %vm1466, %v1445
      %1481 = vst.msk [vmem:[#allocation2 + $0x70] sm:$0xff] %vm1466, %v1447
      %1482 = vst.msk [vmem:[#allocation2 + $0x78] sm:$0xff] %vm1466, %v1449
      %v1484 = vrot.slane %v223, 5
      %v1485 = vrot.slane %v1484, 4
      %v1486 = vrot.slane %v224, 5
      %v1487 = vsel %vm857, %v1485, %v1486
      %v1488 = vrot.slane %v1486, 4
      %v1489 = vrot.slane %v225, 5
      %v1490 = vsel %vm857, %v1488, %v1489
      %v1491 = vunpack.c.l.b16 %v1487
      %v1492 = vunpack.c.l.b16 %v1490
      %v1493 = vpack.c.b16 %v1492, %v1491
      %1494 = vrot.lane.b32.xlu0 %v1004, 32
      %v1495 = vpop.permute.xlu0 %1494
      %1496 = vrot.lane.b32.xlu0 %v1005, 32
      %v1497 = vpop.permute.xlu0 %1496
      %1498 = vrot.lane.b32.xlu0 %v1006, 32
      %v1499 = vpop.permute.xlu0 %1498
      %1500 = vrot.lane.b32.xlu0 %v1007, 32
      %v1501 = vpop.permute.xlu0 %1500
      %1502 = vrot.lane.b32.xlu0 %v1008, 32
      %v1503 = vpop.permute.xlu0 %1502
      %1504 = vrot.lane.b32.xlu0 %v1009, 32
      %v1505 = vpop.permute.xlu0 %1504
      %1506 = vrot.lane.b32.xlu0 %v1010, 32
      %v1507 = vpop.permute.xlu0 %1506
      %1508 = vrot.lane.b32.xlu0 %v1011, 32
      %v1509 = vpop.permute.xlu0 %1508
      %1510 = vrot.lane.b32.xlu0 %v1012, 32
      %v1511 = vpop.permute.xlu0 %1510
      %1512 = vrot.lane.b32.xlu0 %v1013, 32
      %v1513 = vpop.permute.xlu0 %1512
      %1514 = vrot.lane.b32.xlu0 %v1014, 32
      %v1515 = vpop.permute.xlu0 %1514
      %1516 = vrot.lane.b32.xlu0 %v1015, 32
      %v1517 = vpop.permute.xlu0 %1516
      %1518 = vrot.lane.b32.xlu0 %v1016, 32
      %v1519 = vpop.permute.xlu0 %1518
      %1520 = vrot.lane.b32.xlu0 %v1017, 32
      %v1521 = vpop.permute.xlu0 %1520
      %1522 = vrot.lane.b32.xlu0 %v1255, 32
      %v1523 = vpop.permute.xlu0 %1522
      %1524 = vrot.lane.b32.xlu0 %v1493, 32
      %v1525 = vpop.permute.xlu0 %1524
      %vm1542 = vcmask 294144
      %1543 = vst.msk [vmem:[#allocation2] sm:$0xff] %vm1542, %v1495
      %1544 = vst.msk [vmem:[#allocation2 + $0x8] sm:$0xff] %vm1542, %v1497
      %1545 = vst.msk [vmem:[#allocation2 + $0x10] sm:$0xff] %vm1542, %v1499
      %1546 = vst.msk [vmem:[#allocation2 + $0x18] sm:$0xff] %vm1542, %v1501
      %1547 = vst.msk [vmem:[#allocation2 + $0x20] sm:$0xff] %vm1542, %v1503
      %1548 = vst.msk [vmem:[#allocation2 + $0x28] sm:$0xff] %vm1542, %v1505
      %1549 = vst.msk [vmem:[#allocation2 + $0x30] sm:$0xff] %vm1542, %v1507
      %1550 = vst.msk [vmem:[#allocation2 + $0x38] sm:$0xff] %vm1542, %v1509
      %1551 = vst.msk [vmem:[#allocation2 + $0x40] sm:$0xff] %vm1542, %v1511
      %1552 = vst.msk [vmem:[#allocation2 + $0x48] sm:$0xff] %vm1542, %v1513
      %1553 = vst.msk [vmem:[#allocation2 + $0x50] sm:$0xff] %vm1542, %v1515
      %1554 = vst.msk [vmem:[#allocation2 + $0x58] sm:$0xff] %vm1542, %v1517
      %1555 = vst.msk [vmem:[#allocation2 + $0x60] sm:$0xff] %vm1542, %v1519
      %1556 = vst.msk [vmem:[#allocation2 + $0x68] sm:$0xff] %vm1542, %v1521
      %1557 = vst.msk [vmem:[#allocation2 + $0x70] sm:$0xff] %vm1542, %v1523
      %1558 = vst.msk [vmem:[#allocation2 + $0x78] sm:$0xff] %vm1542, %v1525
      %v1559 = vld [vmem:[#allocation2] sm:$0xff]
      %v1560 = vld [vmem:[#allocation2 + $0x8] sm:$0xff]
      %v1561 = vld [vmem:[#allocation2 + $0x10] sm:$0xff]
      %v1562 = vld [vmem:[#allocation2 + $0x18] sm:$0xff]
      %v1563 = vld [vmem:[#allocation2 + $0x20] sm:$0xff]
      %v1564 = vld [vmem:[#allocation2 + $0x28] sm:$0xff]
      %v1565 = vld [vmem:[#allocation2 + $0x30] sm:$0xff]
      %v1566 = vld [vmem:[#allocation2 + $0x38] sm:$0xff]
      %v1567 = vld [vmem:[#allocation2 + $0x40] sm:$0xff]
      %v1568 = vld [vmem:[#allocation2 + $0x48] sm:$0xff]
      %v1569 = vld [vmem:[#allocation2 + $0x50] sm:$0xff]
      %v1570 = vld [vmem:[#allocation2 + $0x58] sm:$0xff]
      %v1571 = vld [vmem:[#allocation2 + $0x60] sm:$0xff]
      %v1572 = vld [vmem:[#allocation2 + $0x68] sm:$0xff]
      %v1573 = vld [vmem:[#allocation2 + $0x70] sm:$0xff]
      %v1574 = vld [vmem:[#allocation2 + $0x78] sm:$0xff]
      %v1575 = vld [vmem:[%s1] sm:$0xf]
      %v1576 = vld [vmem:[%s1 + $0x4] sm:$0xf]
      %v1577 = vld [vmem:[%s1 + $0x8] sm:$0xf]
      %v1578 = vld [vmem:[%s1 + $0xc] sm:$0xf]
      %v1579 = vld [vmem:[%s1 + $0x10] sm:$0x3]
      %v1580 = vld [vmem:[%s2] sm:$0x1]
      %v1582 = vlaneseq
      %v1583 = vshrl.u32 %v1582, 7
      %v1584 = vsub.s32 0, %v1583
      %v1585 = vrot.slane %v1580, %v1584
      %v1592 = vunpack.c.l.b16 %v1575
      %v1593 = vunpack.c.l.b16 %v1576
      %v1594 = vunpack.c.l.b16 %v1577
      %v1595 = vunpack.c.l.b16 %v1578
      %v1596 = vunpack.c.l.b16 %v1579
      %v1597 = vpack.c.b16 %v1593, %v1592
      %v1598 = vpack.c.b16 %v1595, %v1594
      %v1599 = vpack.c.b16 %v1596, %v1596
      %vm1602 = vcmask 293888
      %v1604 = vsel %vm1602, %v1559, 0
      %v1607 = vsel %vm1602, %v1560, 0
      %v1610 = vsel %vm1602, %v1561, 0
      %v1613 = vsel %vm1602, %v1562, 0
      %v1616 = vsel %vm1602, %v1563, 0
      %v1619 = vsel %vm1602, %v1564, 0
      %v1622 = vsel %vm1602, %v1565, 0
      %v1625 = vsel %vm1602, %v1566, 0
      %v1628 = vsel %vm1602, %v1567, 0
      %v1631 = vsel %vm1602, %v1568, 0
      %v1634 = vsel %vm1602, %v1569, 0
      %v1637 = vsel %vm1602, %v1570, 0
      %v1640 = vsel %vm1602, %v1571, 0
      %v1643 = vsel %vm1602, %v1572, 0
      %v1646 = vsel %vm1602, %v1573, 0
      %v1649 = vsel %vm1602, %v1574, 0
      %vm1651 = vcmask 1041408
      %v1653 = vsel %vm1651, %v1599, 0
      %1655 = vmatprep.subr.bf16.mxu0 0
      %1656 = vmatpush1.bf16.msra.mxu0 %v1597
      %1657 = vmatprep.subr.bf16.mxu0 0
      %1658 = vmatpush1.bf16.msra.mxu0 %v1598
      %1659 = vmatprep.subr.bf16.mxu0 0
      %1660 = vmatpush1.bf16.msra.mxu0 %v1653
      %1661 = vmatprep.subr.bf16.mxu0 0
      %1662 = vmatpush1.bf16.msra.mxu0 0
      %1663 = vmatprep.subr.bf16.mxu0 0
      %1664 = vmatpush1.bf16.msra.mxu0 0
      %1665 = vmatprep.subr.bf16.mxu0 0
      %1666 = vmatpush1.bf16.msra.mxu0 0
      %1667 = vmatprep.subr.bf16.mxu0 0
      %1668 = vmatpush1.bf16.msra.mxu0 0
      %1669 = vmatprep.subr.bf16.mxu0 0
      %1670 = vmatpush1.bf16.msra.mxu0 0
      %1671 = vmatprep.subr.bf16.mxu0 0
      %1672 = vmatpush1.bf16.msra.mxu0 0
      %1673 = vmatprep.subr.bf16.mxu0 0
      %1674 = vmatpush1.bf16.msra.mxu0 0
      %1675 = vmatprep.subr.bf16.mxu0 0
      %1676 = vmatpush1.bf16.msra.mxu0 0
      %1677 = vmatprep.subr.bf16.mxu0 0
      %1678 = vmatpush1.bf16.msra.mxu0 0
      %1679 = vmatprep.subr.bf16.mxu0 0
      %1680 = vmatpush1.bf16.msra.mxu0 0
      %1681 = vmatprep.subr.bf16.mxu0 0
      %1682 = vmatpush1.bf16.msra.mxu0 0
      %1683 = vmatprep.subr.bf16.mxu0 0
      %1684 = vmatpush1.bf16.msra.mxu0 0
      %1685 = vmatprep.subr.bf16.mxu0 0
      %1686 = vmatpush1.bf16.msra.mxu0 0
      %1687 = vmatprep.mubr.bf16.mxu0 0
      %1688 = vmatmul.mubr.bf16.gmra.mrb[0].mxu0 %v1604
      %v1689 = vpop.f32.mrb[0].mxu0
      %v1690 = vadd.f32 %v1585, %v1689
      %v1691 = vpop.f32.mrb[0].mxu0
      %v1692 = vpop.f32.mrb[0].mxu0
      %v1693 = vadd.f32 %v1585, %v1692
      %v1694 = vpop.f32.mrb[0].mxu0
      %1695 = vmatprep.mubr.bf16.mxu0 0
      %1696 = vmatmul.mubr.bf16.gmra.mrb[0].mxu0 %v1607
      %v1697 = vpop.f32.mrb[0].mxu0
      %v1698 = vadd.f32 %v1585, %v1697
      %v1699 = vpop.f32.mrb[0].mxu0
      %v1700 = vpop.f32.mrb[0].mxu0
      %v1701 = vadd.f32 %v1585, %v1700
      %v1702 = vpop.f32.mrb[0].mxu0
      %1703 = vmatprep.mubr.bf16.mxu0 0
      %1704 = vmatmul.mubr.bf16.gmra.mrb[0].mxu0 %v1610
      %v1705 = vpop.f32.mrb[0].mxu0
      %v1706 = vadd.f32 %v1585, %v1705
      %v1707 = vpop.f32.mrb[0].mxu0
      %v1708 = vpop.f32.mrb[0].mxu0
      %v1709 = vadd.f32 %v1585, %v1708
      %v1710 = vpop.f32.mrb[0].mxu0
      %1711 = vmatprep.mubr.bf16.mxu0 0
      %1712 = vmatmul.mubr.bf16.gmra.mrb[0].mxu0 %v1613
      %v1713 = vpop.f32.mrb[0].mxu0
      %v1714 = vadd.f32 %v1585, %v1713
      %v1715 = vpop.f32.mrb[0].mxu0
      %v1716 = vpop.f32.mrb[0].mxu0
      %v1717 = vadd.f32 %v1585, %v1716
      %v1718 = vpop.f32.mrb[0].mxu0
      %1719 = vmatprep.mubr.bf16.mxu0 0
      %1720 = vmatmul.mubr.bf16.gmra.mrb[0].mxu0 %v1616
      %v1721 = vpop.f32.mrb[0].mxu0
      %v1722 = vadd.f32 %v1585, %v1721
      %v1723 = vpop.f32.mrb[0].mxu0
      %v1724 = vpop.f32.mrb[0].mxu0
      %v1725 = vadd.f32 %v1585, %v1724
      %v1726 = vpop.f32.mrb[0].mxu0
      %1727 = vmatprep.mubr.bf16.mxu0 0
      %1728 = vmatmul.mubr.bf16.gmra.mrb[0].mxu0 %v1619
      %v1729 = vpop.f32.mrb[0].mxu0
      %v1730 = vadd.f32 %v1585, %v1729
      %v1731 = vpop.f32.mrb[0].mxu0
      %v1732 = vpop.f32.mrb[0].mxu0
      %v1733 = vadd.f32 %v1585, %v1732
      %v1734 = vpop.f32.mrb[0].mxu0
      %1735 = vmatprep.mubr.bf16.mxu0 0
      %1736 = vmatmul.mubr.bf16.gmra.mrb[0].mxu0 %v1622
      %v1737 = vpop.f32.mrb[0].mxu0
      %v1738 = vadd.f32 %v1585, %v1737
      %v1739 = vpop.f32.mrb[0].mxu0
      %v1740 = vpop.f32.mrb[0].mxu0
      %v1741 = vadd.f32 %v1585, %v1740
      %v1742 = vpop.f32.mrb[0].mxu0
      %1743 = vmatprep.mubr.bf16.mxu0 0
      %1744 = vmatmul.mubr.bf16.gmra.mrb[0].mxu0 %v1625
      %v1745 = vpop.f32.mrb[0].mxu0
      %v1746 = vadd.f32 %v1585, %v1745
      %v1747 = vpop.f32.mrb[0].mxu0
      %v1748 = vpop.f32.mrb[0].mxu0
      %v1749 = vadd.f32 %v1585, %v1748
      %v1750 = vpop.f32.mrb[0].mxu0
      %1751 = vmatprep.mubr.bf16.mxu0 0
      %1752 = vmatmul.mubr.bf16.gmra.mrb[0].mxu0 %v1628
      %v1753 = vpop.f32.mrb[0].mxu0
      %v1754 = vadd.f32 %v1585, %v1753
      %v1755 = vpop.f32.mrb[0].mxu0
      %v1756 = vpop.f32.mrb[0].mxu0
      %v1757 = vadd.f32 %v1585, %v1756
      %v1758 = vpop.f32.mrb[0].mxu0
      %1759 = vmatprep.mubr.bf16.mxu0 0
      %1760 = vmatmul.mubr.bf16.gmra.mrb[0].mxu0 %v1631
      %v1761 = vpop.f32.mrb[0].mxu0
      %v1762 = vadd.f32 %v1585, %v1761
      %v1763 = vpop.f32.mrb[0].mxu0
      %v1764 = vpop.f32.mrb[0].mxu0
      %v1765 = vadd.f32 %v1585, %v1764
      %v1766 = vpop.f32.mrb[0].mxu0
      %1767 = vmatprep.mubr.bf16.mxu0 0
      %1768 = vmatmul.mubr.bf16.gmra.mrb[0].mxu0 %v1634
      %v1769 = vpop.f32.mrb[0].mxu0
      %v1770 = vadd.f32 %v1585, %v1769
      %v1771 = vpop.f32.mrb[0].mxu0
      %v1772 = vpop.f32.mrb[0].mxu0
      %v1773 = vadd.f32 %v1585, %v1772
      %v1774 = vpop.f32.mrb[0].mxu0
      %1775 = vmatprep.mubr.bf16.mxu0 0
      %1776 = vmatmul.mubr.bf16.gmra.mrb[0].mxu0 %v1637
      %v1777 = vpop.f32.mrb[0].mxu0
      %v1778 = vadd.f32 %v1585, %v1777
      %v1779 = vpop.f32.mrb[0].mxu0
      %v1780 = vpop.f32.mrb[0].mxu0
      %v1781 = vadd.f32 %v1585, %v1780
      %v1782 = vpop.f32.mrb[0].mxu0
      %1783 = vmatprep.mubr.bf16.mxu0 0
      %1784 = vmatmul.mubr.bf16.gmra.mrb[0].mxu0 %v1640
      %v1785 = vpop.f32.mrb[0].mxu0
      %v1786 = vadd.f32 %v1585, %v1785
      %v1787 = vpop.f32.mrb[0].mxu0
      %v1788 = vpop.f32.mrb[0].mxu0
      %v1789 = vadd.f32 %v1585, %v1788
      %v1790 = vpop.f32.mrb[0].mxu0
      %1791 = vmatprep.mubr.bf16.mxu0 0
      %1792 = vmatmul.mubr.bf16.gmra.mrb[0].mxu0 %v1643
      %v1793 = vpop.f32.mrb[0].mxu0
      %v1794 = vadd.f32 %v1585, %v1793
      %v1795 = vpop.f32.mrb[0].mxu0
      %v1796 = vpop.f32.mrb[0].mxu0
      %v1797 = vadd.f32 %v1585, %v1796
      %v1798 = vpop.f32.mrb[0].mxu0
      %1799 = vmatprep.mubr.bf16.mxu0 0
      %1800 = vmatmul.mubr.bf16.gmra.mrb[0].mxu0 %v1646
      %v1801 = vpop.f32.mrb[0].mxu0
      %v1802 = vadd.f32 %v1585, %v1801
      %v1803 = vpop.f32.mrb[0].mxu0
      %v1804 = vpop.f32.mrb[0].mxu0
      %v1805 = vadd.f32 %v1585, %v1804
      %v1806 = vpop.f32.mrb[0].mxu0
      %1807 = vmatprep.mubr.bf16.mxu0 0
      %1808 = vmatmul.mubr.bf16.gmra.mrb[0].mxu0 %v1649
      %v1809 = vpop.f32.mrb[0].mxu0
      %v1810 = vadd.f32 %v1585, %v1809
      %v1811 = vpop.f32.mrb[0].mxu0
      %v1812 = vpop.f32.mrb[0].mxu0
      %v1813 = vadd.f32 %v1585, %v1812
      %v1814 = vpop.f32.mrb[0].mxu0
      %1815 = vdwg.mxu0
      %v1816 = vmax.f32 %v1690, 0.0
      %v1817 = vmax.f32 %v1693, 0.0
      %v1818 = vmax.f32 %v1698, 0.0
      %v1819 = vmax.f32 %v1701, 0.0
      %v1820 = vmax.f32 %v1706, 0.0
      %v1821 = vmax.f32 %v1709, 0.0
      %v1822 = vmax.f32 %v1714, 0.0
      %v1823 = vmax.f32 %v1717, 0.0
      %v1824 = vmax.f32 %v1722, 0.0
      %v1825 = vmax.f32 %v1725, 0.0
      %v1826 = vmax.f32 %v1730, 0.0
      %v1827 = vmax.f32 %v1733, 0.0
      %v1828 = vmax.f32 %v1738, 0.0
      %v1829 = vmax.f32 %v1741, 0.0
      %v1830 = vmax.f32 %v1746, 0.0
      %v1831 = vmax.f32 %v1749, 0.0
      %v1832 = vmax.f32 %v1754, 0.0
      %v1833 = vmax.f32 %v1757, 0.0
      %v1834 = vmax.f32 %v1762, 0.0
      %v1835 = vmax.f32 %v1765, 0.0
      %v1836 = vmax.f32 %v1770, 0.0
      %v1837 = vmax.f32 %v1773, 0.0
      %v1838 = vmax.f32 %v1778, 0.0
      %v1839 = vmax.f32 %v1781, 0.0
      %v1840 = vmax.f32 %v1786, 0.0
      %v1841 = vmax.f32 %v1789, 0.0
      %v1842 = vmax.f32 %v1794, 0.0
      %v1843 = vmax.f32 %v1797, 0.0
      %v1844 = vmax.f32 %v1802, 0.0
      %v1845 = vmax.f32 %v1805, 0.0
      %v1846 = vmax.f32 %v1810, 0.0
      %v1847 = vmax.f32 %v1813, 0.0
      %v1848 = vpack.c.bf16 %v1817, %v1816
      %v1849 = vpack.c.bf16 %v1819, %v1818
      %v1850 = vpack.c.bf16 %v1821, %v1820
      %v1851 = vpack.c.bf16 %v1823, %v1822
      %v1852 = vpack.c.bf16 %v1825, %v1824
      %v1853 = vpack.c.bf16 %v1827, %v1826
      %v1854 = vpack.c.bf16 %v1829, %v1828
      %v1855 = vpack.c.bf16 %v1831, %v1830
      %v1856 = vpack.c.bf16 %v1833, %v1832
      %v1857 = vpack.c.bf16 %v1835, %v1834
      %v1858 = vpack.c.bf16 %v1837, %v1836
      %v1859 = vpack.c.bf16 %v1839, %v1838
      %v1860 = vpack.c.bf16 %v1841, %v1840
      %v1861 = vpack.c.bf16 %v1843, %v1842
      %v1862 = vpack.c.bf16 %v1845, %v1844
      %v1863 = vpack.c.bf16 %v1847, %v1846
      %v1880 = vunpack.c.l.b16 %v1848
      %v1881 = vunpack.c.h.b16 %v1848
      %v1882 = vunpack.c.l.b16 %v1849
      %v1883 = vunpack.c.h.b16 %v1849
      %v1884 = vunpack.c.l.b16 %v1850
      %v1885 = vunpack.c.h.b16 %v1850
      %v1886 = vunpack.c.l.b16 %v1851
      %v1887 = vunpack.c.h.b16 %v1851
      %v1888 = vunpack.c.l.b16 %v1852
      %v1889 = vunpack.c.h.b16 %v1852
      %v1890 = vunpack.c.l.b16 %v1853
      %v1891 = vunpack.c.h.b16 %v1853
      %v1892 = vunpack.c.l.b16 %v1854
      %v1893 = vunpack.c.h.b16 %v1854
      %v1894 = vunpack.c.l.b16 %v1855
      %v1895 = vunpack.c.h.b16 %v1855
      %v1896 = vunpack.c.l.b16 %v1856
      %v1897 = vunpack.c.h.b16 %v1856
      %v1898 = vunpack.c.l.b16 %v1857
      %v1899 = vunpack.c.h.b16 %v1857
      %v1900 = vunpack.c.l.b16 %v1858
      %v1901 = vunpack.c.h.b16 %v1858
      %v1902 = vunpack.c.l.b16 %v1859
      %v1903 = vunpack.c.h.b16 %v1859
      %v1904 = vunpack.c.l.b16 %v1860
      %v1905 = vunpack.c.h.b16 %v1860
      %v1906 = vunpack.c.l.b16 %v1861
      %v1907 = vunpack.c.h.b16 %v1861
      %v1908 = vunpack.c.l.b16 %v1862
      %v1909 = vunpack.c.h.b16 %v1862
      %v1910 = vunpack.c.l.b16 %v1863
      %v1911 = vunpack.c.h.b16 %v1863
      %v1912 = vpack.c.b16 %v1880, %v1880
      %v1913 = vpack.c.b16 %v1881, %v1881
      %v1914 = vpack.c.b16 %v1882, %v1882
      %v1915 = vpack.c.b16 %v1883, %v1883
      %v1916 = vpack.c.b16 %v1884, %v1884
      %v1917 = vpack.c.b16 %v1885, %v1885
      %v1918 = vpack.c.b16 %v1886, %v1886
      %v1919 = vpack.c.b16 %v1887, %v1887
      %v1920 = vpack.c.b16 %v1888, %v1888
      %v1921 = vpack.c.b16 %v1889, %v1889
      %v1922 = vpack.c.b16 %v1890, %v1890
      %v1923 = vpack.c.b16 %v1891, %v1891
      %v1924 = vpack.c.b16 %v1892, %v1892
      %v1925 = vpack.c.b16 %v1893, %v1893
      %v1926 = vpack.c.b16 %v1894, %v1894
      %v1927 = vpack.c.b16 %v1895, %v1895
      %v1928 = vpack.c.b16 %v1896, %v1896
      %v1929 = vpack.c.b16 %v1897, %v1897
      %v1930 = vpack.c.b16 %v1898, %v1898
      %v1931 = vpack.c.b16 %v1899, %v1899
      %v1932 = vpack.c.b16 %v1900, %v1900
      %v1933 = vpack.c.b16 %v1901, %v1901
      %v1934 = vpack.c.b16 %v1902, %v1902
      %v1935 = vpack.c.b16 %v1903, %v1903
      %v1936 = vpack.c.b16 %v1904, %v1904
      %v1937 = vpack.c.b16 %v1905, %v1905
      %v1938 = vpack.c.b16 %v1906, %v1906
      %v1939 = vpack.c.b16 %v1907, %v1907
      %v1940 = vpack.c.b16 %v1908, %v1908
      %v1941 = vpack.c.b16 %v1909, %v1909
      %v1942 = vpack.c.b16 %v1910, %v1910
      %v1943 = vpack.c.b16 %v1911, %v1911
      %vm1976 = vcmask 257024
      %1977 = vst.msk [vmem:[%s170] sm:$0xf] %vm1976, %v1912
      %1978 = vst.msk [vmem:[%s170 + $0x4] sm:$0xf] %vm1976, %v1913
      %1979 = vst.msk [vmem:[%s170 + $0x8] sm:$0xf] %vm1976, %v1914
      %1980 = vst.msk [vmem:[%s170 + $0xc] sm:$0xf] %vm1976, %v1915
      %1981 = vst.msk [vmem:[%s170 + $0x10] sm:$0xf] %vm1976, %v1916
      %1982 = vst.msk [vmem:[%s170 + $0x14] sm:$0xf] %vm1976, %v1917
      %1983 = vst.msk [vmem:[%s170 + $0x18] sm:$0xf] %vm1976, %v1918
      %1984 = vst.msk [vmem:[%s170 + $0x1c] sm:$0xf] %vm1976, %v1919
      %1985 = vst.msk [vmem:[%s170 + $0x20] sm:$0xf] %vm1976, %v1920
      %1986 = vst.msk [vmem:[%s170 + $0x24] sm:$0xf] %vm1976, %v1921
      %1987 = vst.msk [vmem:[%s170 + $0x28] sm:$0xf] %vm1976, %v1922
      %1988 = vst.msk [vmem:[%s170 + $0x2c] sm:$0xf] %vm1976, %v1923
      %1989 = vst.msk [vmem:[%s170 + $0x30] sm:$0xf] %vm1976, %v1924
      %1990 = vst.msk [vmem:[%s170 + $0x34] sm:$0xf] %vm1976, %v1925
      %1991 = vst.msk [vmem:[%s170 + $0x38] sm:$0xf] %vm1976, %v1926
      %1992 = vst.msk [vmem:[%s170 + $0x3c] sm:$0xf] %vm1976, %v1927
      %1993 = vst.msk [vmem:[%s170 + $0x40] sm:$0xf] %vm1976, %v1928
      %1994 = vst.msk [vmem:[%s170 + $0x44] sm:$0xf] %vm1976, %v1929
      %1995 = vst.msk [vmem:[%s170 + $0x48] sm:$0xf] %vm1976, %v1930
      %1996 = vst.msk [vmem:[%s170 + $0x4c] sm:$0xf] %vm1976, %v1931
      %1997 = vst.msk [vmem:[%s170 + $0x50] sm:$0xf] %vm1976, %v1932
      %1998 = vst.msk [vmem:[%s170 + $0x54] sm:$0xf] %vm1976, %v1933
      %1999 = vst.msk [vmem:[%s170 + $0x58] sm:$0xf] %vm1976, %v1934
      %2000 = vst.msk [vmem:[%s170 + $0x5c] sm:$0xf] %vm1976, %v1935
      %2001 = vst.msk [vmem:[%s170 + $0x60] sm:$0xf] %vm1976, %v1936
      %2002 = vst.msk [vmem:[%s170 + $0x64] sm:$0xf] %vm1976, %v1937
      %2003 = vst.msk [vmem:[%s170 + $0x68] sm:$0xf] %vm1976, %v1938
      %2004 = vst.msk [vmem:[%s170 + $0x6c] sm:$0xf] %vm1976, %v1939
      %2005 = vst.msk [vmem:[%s170 + $0x70] sm:$0xf] %vm1976, %v1940
      %2006 = vst.msk [vmem:[%s170 + $0x74] sm:$0xf] %vm1976, %v1941
      %2007 = vst.msk [vmem:[%s170 + $0x78] sm:$0xf] %vm1976, %v1942
      %2008 = vst.msk [vmem:[%s170 + $0x7c] sm:$0xf] %vm1976, %v1943
      %p2009 = scmp.lt.s32.totalorder %s14, 1
      %s2010 = scalar_select %p2009, %s14, 1
      %s2011 = smul.addr %s2010, 32
      %s2012 = smul.addr %s2011, 4
      %s2013 = scalar_lea.vmem %s3, %s2012
      // Predicated region
      $region33: #{tpu_custom_call.1} parent=31 // pred_check
        %p2014 = pneg %p100
      $region34: #{tpu_custom_call.1} parent=31 // pred_check_branch
        %2016 = sbr.rel (%p2014) target = $region36
      $region35: #{tpu_custom_call.1} parent=31 // pred_region
        _
      $region36: #{tpu_custom_call.1} parent=31 // pred_fallthru
        _
    $region32: #{tpu_custom_call.1} parent=5 // pred_fallthru
      _
    %p2017 = scmp.le.s32.totalorder 2, %s9
    // Predicated region
    $region37: #{tpu_custom_call.1} parent=5 // pred_check
      %p2018 = pneg %p2017
    $region38: #{tpu_custom_call.1} parent=5 // pred_check_branch
      %2020 = sbr.rel (%p2018) target = $region40
    $region39: #{tpu_custom_call.1} parent=5 // pred_region
      %s2021 = ssub.s32 %s9, 2
      // Predicated region
      $region41: #{tpu_custom_call.1} parent=39 // pred_check
        %p2022 = pneg %p106
      $region42: #{tpu_custom_call.1} parent=39 // pred_check_branch
        %2024 = sbr.rel (%p2022) target = $region44
      $region43: #{tpu_custom_call.1} parent=39 // pred_region
        %p2025 = scmp.lt.s32.totalorder %s15, 1
        %s2026 = scalar_select %p2025, %s15, 1
        %s2027 = smul.addr %s2026, 32
        %s2028 = smul.addr %s2027, 4
        %s2029 = scalar_lea.vmem %s3, %s2028
      $region44: #{tpu_custom_call.1} parent=39 // pred_fallthru
        _
    $region40: #{tpu_custom_call.1} parent=5 // pred_fallthru
      _
  $region6: #{tpu_custom_call.1} parent=0 // loop_footer
    %s13 = sadd.s32 1, %s9
  $region7: #{tpu_custom_call.1} parent=0 // loop_footer_branch
    %8 = sbr.rel target = $region3
  $region8: #{tpu_custom_call.1} parent=0 // loop_exit
    _

</llo_original>
